<compile_context>
chip_gen: v7x
topology: tpu7x:2x2x1
jax: 0.10.0
libtpu: 0.0.40
codegen_flags: <defaults>
</compile_context>

<pallas_src>
import math

import jax
import jax.numpy as jnp
from jax import lax
from jax.experimental import pallas as pl
from jax.experimental.pallas import tpu as pltpu


# ----------------------------- kernel helpers ------------------------------


def _layernorm(h, g_ref, b_ref, eps=1e-5):
    """PyTorch nn.LayerNorm over the last dim (biased variance, eps inside sqrt)."""
    mu = jnp.mean(h, axis=-1, keepdims=True)
    d = h - mu
    var = jnp.mean(d * d, axis=-1, keepdims=True)
    inv = lax.rsqrt(var + eps)
    return d * inv * g_ref[...] + b_ref[...]


def _single_head_attention(q2, kv2, bb, sq, skv, wq_ref, wk_ref, wv_ref, wo_ref):
    """attention(Q(x), K(kv), V(kv)) + head-mixing fc (no bias).

    q2: (bb*sq, D) flattened decoder tokens; kv2: (bb*skv, D) flattened kv
    tokens.  Projections run as dense 2D matmuls; only the score / value
    contractions are batched.
    """
    d_attn = wq_ref.shape[1]
    d_val = wv_ref.shape[1]

    q = jnp.dot(q2, wq_ref[...], preferred_element_type=jnp.float32)      # (bb*sq, Da)
    k = jnp.dot(kv2, wk_ref[...], preferred_element_type=jnp.float32)     # (bb*skv, Da)
    v = jnp.dot(kv2, wv_ref[...], preferred_element_type=jnp.float32)     # (bb*skv, D)

    q3 = q.reshape(bb, sq, d_attn)
    k3 = k.reshape(bb, skv, d_attn)
    v3 = v.reshape(bb, skv, d_val)

    scale = 1.0 / math.sqrt(d_attn)
    s = jnp.einsum("bqd,bkd->bqk", q3, k3,
                   preferred_element_type=jnp.float32) * scale            # (bb, sq, skv)
    s = s - jnp.max(s, axis=-1, keepdims=True)
    p = jnp.exp(s)
    p = p * pl.reciprocal(jnp.sum(p, axis=-1, keepdims=True), approx=True)
    a = jnp.einsum("bqk,bkd->bqd", p, v3,
                   preferred_element_type=jnp.float32)                    # (bb, sq, D)
    a2 = a.reshape(bb * sq, d_val)
    return jnp.dot(a2, wo_ref[...], preferred_element_type=jnp.float32)   # (bb*sq, D)


# -------------------------------- the kernel -------------------------------


def _decoder_layer_kernel(
    x_ref, enc_ref,
    wq1_ref, wk1_ref, wv1_ref, wo1_ref,
    wq2_ref, wk2_ref, wv2_ref, wo2_ref,
    wfc1_ref, bfc1_ref, wfc2_ref, bfc2_ref,
    g1_ref, b1_ref, g2_ref, b2_ref, g3_ref, b3_ref,
    o_ref,
):
    bb, sq, d = x_ref.shape
    _, skv, _ = enc_ref.shape

    x = x_ref[...].astype(jnp.float32).reshape(bb * sq, d)       # (bb*S, D)
    enc = enc_ref[...].astype(jnp.float32).reshape(bb * skv, d)  # (bb*Se, D)

    # --- block 1: self-attention + residual + layernorm -----------------
    a = _single_head_attention(x, x, bb, sq, sq, wq1_ref, wk1_ref, wv1_ref, wo1_ref)
    x = _layernorm(a + x, g1_ref, b1_ref)

    # --- block 2: cross-attention (kv = enc) + residual + layernorm -----
    a = _single_head_attention(x, enc, bb, sq, skv, wq2_ref, wk2_ref, wv2_ref, wo2_ref)
    x = _layernorm(a + x, g2_ref, b2_ref)

    # --- block 3: position-wise FFN  a = fc1(elu(fc2(x))) ---------------
    h = jnp.dot(x, wfc2_ref[...], preferred_element_type=jnp.float32) + bfc2_ref[...]
    h = jnp.where(h > 0, h, jnp.exp(jnp.minimum(h, 0.0)) - 1.0)           # ELU(alpha=1)
    a = jnp.dot(h, wfc1_ref[...], preferred_element_type=jnp.float32) + bfc1_ref[...]
    # TODO(synk): nn.Dropout is identity here (eval-mode forward); a train-mode
    # stochastic mask would use pltpu.prng_seed + pltpu.stateful_bernoulli.
    x = _layernorm(x + a, g3_ref, b3_ref)

    o_ref[...] = x.reshape(bb, sq, d).astype(o_ref.dtype)


# -------------------------------- wrapper ----------------------------------


def _choose_batch_block(B, S, Se, D):
    """Largest divisor of B that (a) keeps the f32 x/enc/out working set well
    under the scoped-VMEM budget and (b) leaves >=2 grid steps so megacore
    (dimension_semantics="parallel") still has something to split."""
    budget = 12 * 1024 * 1024
    per_b = 4 * (2 * S + Se) * D * 2          # bytes/elem incl. double-buffering
    bb_vmem = max(1, budget // max(per_b, 1))
    target = min(B, bb_vmem)
    if B >= 2:
        target = min(target, max(1, B // 2))
    for bb in range(target, 0, -1):
        if B % bb == 0:
            return bb
    return 1


def decoder_layer(x, enc, params):
    """x: (B, S, dim_val); enc: (B, S_enc, dim_val). Returns (B, S, dim_val)."""
    B, S, D = x.shape
    Be, Se, De = enc.shape
    assert Be == B and De == D

    bb = _choose_batch_block(B, S, Se, D)
    n_blocks = B // bb

    # TPU-friendly parameter layout: 2D weights as-is, 1D bias / layernorm
    # vectors as (1, D) rows (kernel-side adds become plain 2D broadcasts).
    row = lambda a: a.reshape(1, D).astype(jnp.float32)
    w = lambda a: a.astype(jnp.float32)

    weights = [
        w(params["wq1"]), w(params["wk1"]), w(params["wv1"]), w(params["wo1"]),
        w(params["wq2"]), w(params["wk2"]), w(params["wv2"]), w(params["wo2"]),
        w(params["wfc1"]), row(params["bfc1"]), w(params["wfc2"]), row(params["bfc2"]),
        row(params["g1"]), row(params["b1"]),
        row(params["g2"]), row(params["b2"]),
        row(params["g3"]), row(params["b3"]),
    ]

    def full_spec(arr):
        # Whole (small) parameter array stays VMEM-resident across the grid.
        return pl.BlockSpec(arr.shape, lambda b: (0, 0))

    in_specs = (
        [
            pl.BlockSpec((bb, S, D), lambda b: (b, 0, 0)),    # x   -> (bb, S, D)
            pl.BlockSpec((bb, Se, D), lambda b: (b, 0, 0)),   # enc -> (bb, Se, D)
        ]
        + [full_spec(a) for a in weights]
    )

    return pl.pallas_call(
        _decoder_layer_kernel,
        out_shape=jax.ShapeDtypeStruct((B, S, D), x.dtype),
        grid=(n_blocks,),
        in_specs=in_specs,
        out_specs=pl.BlockSpec((bb, S, D), lambda b: (b, 0, 0)),
        compiler_params=pltpu.CompilerParams(
            dimension_semantics=("parallel",),
        ),
    )(x, enc, *weights)


# ----------------------------- pure-JAX reference ---------------------------


def decoder_layer_ref(x, enc, p):
    def ln(h, g, b, eps=1e-5):
        mu = jnp.mean(h, axis=-1, keepdims=True)
        var = jnp.mean((h - mu) ** 2, axis=-1, keepdims=True)
        return (h - mu) / jnp.sqrt(var + eps) * g + b

    def attn(q_in, kv_in, wq, wk, wv, wo):
        q, k, v = q_in @ wq, kv_in @ wk, kv_in @ wv
        s = (q @ jnp.swapaxes(k, -1, -2)) / jnp.sqrt(jnp.float32(q.shape[-1]))
        return (jax.nn.softmax(s, axis=-1) @ v) @ wo

    x = x.astype(jnp.float32)
    enc = enc.astype(jnp.float32)
    a = attn(x, x, p["wq1"], p["wk1"], p["wv1"], p["wo1"])
    x = ln(a + x, p["g1"], p["b1"])
    a = attn(x, enc, p["wq2"], p["wk2"], p["wv2"], p["wo2"])
    x = ln(a + x, p["g2"], p["b2"])
    h = jax.nn.elu(x @ p["wfc2"] + p["bfc2"])
    a = h @ p["wfc1"] + p["bfc1"]
    x = ln(x + a, p["g3"], p["b3"])
    return x


def init_params(key, dim_val, dim_attn):
    ks = jax.random.split(key, 12)

    def lin(k, din, dout):
        return jax.random.normal(k, (din, dout), jnp.float32) / math.sqrt(din)

    return dict(
        wq1=lin(ks[0], dim_val, dim_attn), wk1=lin(ks[1], dim_val, dim_attn),
        wv1=lin(ks[2], dim_val, dim_val), wo1=lin(ks[3], dim_val, dim_val),
        wq2=lin(ks[4], dim_val, dim_attn), wk2=lin(ks[5], dim_val, dim_attn),
        wv2=lin(ks[6], dim_val, dim_val), wo2=lin(ks[7], dim_val, dim_val),
        wfc1=lin(ks[8], dim_val, dim_val),
        bfc1=0.1 * jax.random.normal(ks[9], (dim_val,), jnp.float32),
        wfc2=lin(ks[10], dim_val, dim_val),
        bfc2=0.1 * jax.random.normal(ks[11], (dim_val,), jnp.float32),
        g1=jnp.ones((dim_val,), jnp.float32), b1=jnp.zeros((dim_val,), jnp.float32),
        g2=jnp.ones((dim_val,), jnp.float32), b2=jnp.zeros((dim_val,), jnp.float32),
        g3=jnp.ones((dim_val,), jnp.float32), b3=jnp.zeros((dim_val,), jnp.float32),
    )


if __name__ == "__main__":
    B, S_DEC, S_ENC = 2, 8, 16
    DIM_VAL, DIM_ATTN = 32, 16        # n_heads = 1 (the module's default)
    # TODO(synk): n_heads > 1 would need per-head weights plus the PyTorch
    # stack(dim=-1)+flatten interleaved concat; only the default single-head
    # path is implemented here.

    key = jax.random.PRNGKey(0)
    kx, ke, kp = jax.random.split(key, 3)
    x = jax.random.normal(kx, (B, S_DEC, DIM_VAL), jnp.float32)
    enc = jax.random.normal(ke, (B, S_ENC, DIM_VAL), jnp.float32)
    params = init_params(kp, DIM_VAL, DIM_ATTN)

    out = decoder_layer(x, enc, params)
    out = jax.block_until_ready(out)

    ref = decoder_layer_ref(x, enc, params)
    assert out.shape == (B, S_DEC, DIM_VAL)
    max_err = jnp.max(jnp.abs(out.astype(jnp.float32) - ref))
    assert jnp.allclose(out.astype(jnp.float32), ref, atol=2e-2, rtol=2e-2), (
        f"mismatch vs reference; max abs err = {max_err}"
    )
    print("KERNEL_OK")
</pallas_src>

<mosaic_0001>
module attributes {stable_mosaic.version = 11 : i64} {
  func.func @_decoder_layer_kernel(%arg0: i32, %arg1: memref<1x8x32xf32, #tpu.memory_space<vmem>>, %arg2: memref<1x16x32xf32, #tpu.memory_space<vmem>>, %arg3: memref<32x16xf32, #tpu.memory_space<vmem>>, %arg4: memref<32x16xf32, #tpu.memory_space<vmem>>, %arg5: memref<32x32xf32, #tpu.memory_space<vmem>>, %arg6: memref<32x32xf32, #tpu.memory_space<vmem>>, %arg7: memref<32x16xf32, #tpu.memory_space<vmem>>, %arg8: memref<32x16xf32, #tpu.memory_space<vmem>>, %arg9: memref<32x32xf32, #tpu.memory_space<vmem>>, %arg10: memref<32x32xf32, #tpu.memory_space<vmem>>, %arg11: memref<32x32xf32, #tpu.memory_space<vmem>>, %arg12: memref<1x32xf32, #tpu.memory_space<vmem>>, %arg13: memref<32x32xf32, #tpu.memory_space<vmem>>, %arg14: memref<1x32xf32, #tpu.memory_space<vmem>>, %arg15: memref<1x32xf32, #tpu.memory_space<vmem>>, %arg16: memref<1x32xf32, #tpu.memory_space<vmem>>, %arg17: memref<1x32xf32, #tpu.memory_space<vmem>>, %arg18: memref<1x32xf32, #tpu.memory_space<vmem>>, %arg19: memref<1x32xf32, #tpu.memory_space<vmem>>, %arg20: memref<1x32xf32, #tpu.memory_space<vmem>>, %arg21: memref<1x8x32xf32, #tpu.memory_space<vmem>>) attributes {dimension_semantics = [#tpu.dimension_semantics<parallel>], iteration_bounds = array<i64: 2>, scalar_prefetch = 0 : i64, scratch_operands = 0 : i64, tpu.core_type = #tpu.core_type<tc>, window_params = [{transform_indices = @transform_0, window_bounds = array<i64: 1, 8, 32>}, {transform_indices = @transform_1, window_bounds = array<i64: 1, 16, 32>}, {pipeline_mode = #tpu.pipeline_mode<synchronous>, transform_indices = @transform_2, window_bounds = array<i64: 32, 16>}, {pipeline_mode = #tpu.pipeline_mode<synchronous>, transform_indices = @transform_3, window_bounds = array<i64: 32, 16>}, {pipeline_mode = #tpu.pipeline_mode<synchronous>, transform_indices = @transform_4, window_bounds = array<i64: 32, 32>}, {pipeline_mode = #tpu.pipeline_mode<synchronous>, transform_indices = @transform_5, window_bounds = array<i64: 32, 32>}, {pipeline_mode = #tpu.pipeline_mode<synchronous>, transform_indices = @transform_6, window_bounds = array<i64: 32, 16>}, {pipeline_mode = #tpu.pipeline_mode<synchronous>, transform_indices = @transform_7, window_bounds = array<i64: 32, 16>}, {pipeline_mode = #tpu.pipeline_mode<synchronous>, transform_indices = @transform_8, window_bounds = array<i64: 32, 32>}, {pipeline_mode = #tpu.pipeline_mode<synchronous>, transform_indices = @transform_9, window_bounds = array<i64: 32, 32>}, {pipeline_mode = #tpu.pipeline_mode<synchronous>, transform_indices = @transform_10, window_bounds = array<i64: 32, 32>}, {pipeline_mode = #tpu.pipeline_mode<synchronous>, transform_indices = @transform_11, window_bounds = array<i64: 1, 32>}, {pipeline_mode = #tpu.pipeline_mode<synchronous>, transform_indices = @transform_12, window_bounds = array<i64: 32, 32>}, {pipeline_mode = #tpu.pipeline_mode<synchronous>, transform_indices = @transform_13, window_bounds = array<i64: 1, 32>}, {pipeline_mode = #tpu.pipeline_mode<synchronous>, transform_indices = @transform_14, window_bounds = array<i64: 1, 32>}, {pipeline_mode = #tpu.pipeline_mode<synchronous>, transform_indices = @transform_15, window_bounds = array<i64: 1, 32>}, {pipeline_mode = #tpu.pipeline_mode<synchronous>, transform_indices = @transform_16, window_bounds = array<i64: 1, 32>}, {pipeline_mode = #tpu.pipeline_mode<synchronous>, transform_indices = @transform_17, window_bounds = array<i64: 1, 32>}, {pipeline_mode = #tpu.pipeline_mode<synchronous>, transform_indices = @transform_18, window_bounds = array<i64: 1, 32>}, {pipeline_mode = #tpu.pipeline_mode<synchronous>, transform_indices = @transform_19, window_bounds = array<i64: 1, 32>}, {transform_indices = @transform_20, window_bounds = array<i64: 1, 8, 32>}]} {
    %c0 = arith.constant 0 : index
    %c0_0 = arith.constant 0 : index
    %c0_1 = arith.constant 0 : index
    %0 = vector.load %arg1[%c0, %c0_0, %c0_1] : memref<1x8x32xf32, #tpu.memory_space<vmem>>, vector<1x8x32xf32>
    %1 = vector.shape_cast %0 : vector<1x8x32xf32> to vector<8x32xf32>
    %c0_2 = arith.constant 0 : index
    %c0_3 = arith.constant 0 : index
    %c0_4 = arith.constant 0 : index
    %2 = vector.load %arg2[%c0_2, %c0_3, %c0_4] : memref<1x16x32xf32, #tpu.memory_space<vmem>>, vector<1x16x32xf32>
    %3 = vector.shape_cast %2 : vector<1x16x32xf32> to vector<16x32xf32>
    %c0_5 = arith.constant 0 : index
    %c0_6 = arith.constant 0 : index
    %4 = vector.load %arg3[%c0_5, %c0_6] : memref<32x16xf32, #tpu.memory_space<vmem>>, vector<32x16xf32>
    %cst = arith.constant dense<0.000000e+00> : vector<8x16xf32>
    %5 = tpu.matmul %1, %4, %cst {dimension_numbers = #tpu.dot_dimension_numbers<[1], [0], [0], [1], [0, 0, 1, 1], [], []>} : vector<8x32xf32>, vector<32x16xf32>, vector<8x16xf32> -> vector<8x16xf32>
    %c0_7 = arith.constant 0 : index
    %c0_8 = arith.constant 0 : index
    %6 = vector.load %arg4[%c0_7, %c0_8] : memref<32x16xf32, #tpu.memory_space<vmem>>, vector<32x16xf32>
    %cst_9 = arith.constant dense<0.000000e+00> : vector<8x16xf32>
    %7 = tpu.matmul %1, %6, %cst_9 {dimension_numbers = #tpu.dot_dimension_numbers<[1], [0], [0], [1], [0, 0, 1, 1], [], []>} : vector<8x32xf32>, vector<32x16xf32>, vector<8x16xf32> -> vector<8x16xf32>
    %c0_10 = arith.constant 0 : index
    %c0_11 = arith.constant 0 : index
    %8 = vector.load %arg5[%c0_10, %c0_11] : memref<32x32xf32, #tpu.memory_space<vmem>>, vector<32x32xf32>
    %cst_12 = arith.constant dense<0.000000e+00> : vector<8x32xf32>
    %9 = tpu.matmul %1, %8, %cst_12 {dimension_numbers = #tpu.dot_dimension_numbers<[1], [0], [0], [1], [0, 0, 1, 1], [], []>} : vector<8x32xf32>, vector<32x32xf32>, vector<8x32xf32> -> vector<8x32xf32>
    %10 = vector.shape_cast %5 : vector<8x16xf32> to vector<1x8x16xf32>
    %11 = vector.shape_cast %7 : vector<8x16xf32> to vector<1x8x16xf32>
    %12 = vector.shape_cast %9 : vector<8x32xf32> to vector<1x8x32xf32>
    "tpu.trace_start"() <{level = 10 : i32, message = "bqd,bkd->bqk"}> : () -> ()
    %cst_13 = arith.constant dense<0.000000e+00> : vector<1x8x8xf32>
    %13 = tpu.matmul %10, %11, %cst_13 {dimension_numbers = #tpu.dot_dimension_numbers<[2], [2], [1], [1], [0, 0, 0, 1, 1, 1], [0], [0]>} : vector<1x8x16xf32>, vector<1x8x16xf32>, vector<1x8x8xf32> -> vector<1x8x8xf32>
    "tpu.trace_stop"() : () -> ()
    %cst_14 = arith.constant 2.500000e-01 : f32
    %14 = vector.broadcast %cst_14 : f32 to vector<1x8x8xf32>
    %15 = arith.mulf %13, %14 : vector<1x8x8xf32>
    %cst_15 = arith.constant dense<0xFF800000> : vector<1x8xf32>
    %16 = vector.multi_reduction <maximumf>, %15, %cst_15 [2] : vector<1x8x8xf32> to vector<1x8xf32>
    %17 = vector.shape_cast %16 : vector<1x8xf32> to vector<1x8x1xf32>
    %18 = vector.broadcast %17 : vector<1x8x1xf32> to vector<1x8x8xf32>
    %19 = arith.subf %15, %18 : vector<1x8x8xf32>
    %20 = math.exp %19 : vector<1x8x8xf32>
    %cst_16 = arith.constant dense<0.000000e+00> : vector<1x8xf32>
    %21 = vector.multi_reduction <add>, %20, %cst_16 [2] : vector<1x8x8xf32> to vector<1x8xf32>
    %22 = vector.shape_cast %21 : vector<1x8xf32> to vector<1x8x1xf32>
    %23 = tpu.reciprocal %22 {approx = true} : vector<1x8x1xf32> -> vector<1x8x1xf32>
    %24 = vector.broadcast %23 : vector<1x8x1xf32> to vector<1x8x8xf32>
    %25 = arith.mulf %20, %24 : vector<1x8x8xf32>
    "tpu.trace_start"() <{level = 10 : i32, message = "bqk,bkd->bqd"}> : () -> ()
    %cst_17 = arith.constant dense<0.000000e+00> : vector<1x8x32xf32>
    %26 = tpu.matmul %25, %12, %cst_17 {dimension_numbers = #tpu.dot_dimension_numbers<[2], [1], [1], [2], [0, 0, 0, 1, 1, 2], [0], [0]>} : vector<1x8x8xf32>, vector<1x8x32xf32>, vector<1x8x32xf32> -> vector<1x8x32xf32>
    "tpu.trace_stop"() : () -> ()
    %27 = vector.shape_cast %26 : vector<1x8x32xf32> to vector<8x32xf32>
    %c0_18 = arith.constant 0 : index
    %c0_19 = arith.constant 0 : index
    %28 = vector.load %arg6[%c0_18, %c0_19] : memref<32x32xf32, #tpu.memory_space<vmem>>, vector<32x32xf32>
    %cst_20 = arith.constant dense<0.000000e+00> : vector<8x32xf32>
    %29 = tpu.matmul %27, %28, %cst_20 {dimension_numbers = #tpu.dot_dimension_numbers<[1], [0], [0], [1], [0, 0, 1, 1], [], []>} : vector<8x32xf32>, vector<32x32xf32>, vector<8x32xf32> -> vector<8x32xf32>
    %30 = arith.addf %29, %1 : vector<8x32xf32>
    %cst_21 = arith.constant dense<0.000000e+00> : vector<8xf32>
    %31 = vector.multi_reduction <add>, %30, %cst_21 [1] : vector<8x32xf32> to vector<8xf32>
    %32 = vector.shape_cast %31 : vector<8xf32> to vector<8x1xf32>
    %cst_22 = arith.constant 3.200000e+01 : f32
    %33 = vector.broadcast %cst_22 : f32 to vector<8x1xf32>
    %34 = arith.divf %32, %33 : vector<8x1xf32>
    %35 = vector.broadcast %34 : vector<8x1xf32> to vector<8x32xf32>
    %36 = arith.subf %30, %35 : vector<8x32xf32>
    %37 = arith.mulf %36, %36 : vector<8x32xf32>
    %cst_23 = arith.constant dense<0.000000e+00> : vector<8xf32>
    %38 = vector.multi_reduction <add>, %37, %cst_23 [1] : vector<8x32xf32> to vector<8xf32>
    %39 = vector.shape_cast %38 : vector<8xf32> to vector<8x1xf32>
    %cst_24 = arith.constant 3.200000e+01 : f32
    %40 = vector.broadcast %cst_24 : f32 to vector<8x1xf32>
    %41 = arith.divf %39, %40 : vector<8x1xf32>
    %cst_25 = arith.constant 9.99999974E-6 : f32
    %42 = vector.broadcast %cst_25 : f32 to vector<8x1xf32>
    %43 = arith.addf %41, %42 : vector<8x1xf32>
    %44 = math.rsqrt %43 : vector<8x1xf32>
    %45 = vector.broadcast %44 : vector<8x1xf32> to vector<8x32xf32>
    %46 = arith.mulf %36, %45 : vector<8x32xf32>
    %c0_26 = arith.constant 0 : index
    %c0_27 = arith.constant 0 : index
    %47 = vector.load %arg15[%c0_26, %c0_27] : memref<1x32xf32, #tpu.memory_space<vmem>>, vector<1x32xf32>
    %48 = vector.broadcast %47 : vector<1x32xf32> to vector<8x32xf32>
    %49 = arith.mulf %46, %48 : vector<8x32xf32>
    %c0_28 = arith.constant 0 : index
    %c0_29 = arith.constant 0 : index
    %50 = vector.load %arg16[%c0_28, %c0_29] : memref<1x32xf32, #tpu.memory_space<vmem>>, vector<1x32xf32>
    %51 = vector.broadcast %50 : vector<1x32xf32> to vector<8x32xf32>
    %52 = arith.addf %49, %51 : vector<8x32xf32>
    %c0_30 = arith.constant 0 : index
    %c0_31 = arith.constant 0 : index
    %53 = vector.load %arg7[%c0_30, %c0_31] : memref<32x16xf32, #tpu.memory_space<vmem>>, vector<32x16xf32>
    %cst_32 = arith.constant dense<0.000000e+00> : vector<8x16xf32>
    %54 = tpu.matmul %52, %53, %cst_32 {dimension_numbers = #tpu.dot_dimension_numbers<[1], [0], [0], [1], [0, 0, 1, 1], [], []>} : vector<8x32xf32>, vector<32x16xf32>, vector<8x16xf32> -> vector<8x16xf32>
    %c0_33 = arith.constant 0 : index
    %c0_34 = arith.constant 0 : index
    %55 = vector.load %arg8[%c0_33, %c0_34] : memref<32x16xf32, #tpu.memory_space<vmem>>, vector<32x16xf32>
    %cst_35 = arith.constant dense<0.000000e+00> : vector<16x16xf32>
    %56 = tpu.matmul %3, %55, %cst_35 {dimension_numbers = #tpu.dot_dimension_numbers<[1], [0], [0], [1], [0, 0, 1, 1], [], []>} : vector<16x32xf32>, vector<32x16xf32>, vector<16x16xf32> -> vector<16x16xf32>
    %c0_36 = arith.constant 0 : index
    %c0_37 = arith.constant 0 : index
    %57 = vector.load %arg9[%c0_36, %c0_37] : memref<32x32xf32, #tpu.memory_space<vmem>>, vector<32x32xf32>
    %cst_38 = arith.constant dense<0.000000e+00> : vector<16x32xf32>
    %58 = tpu.matmul %3, %57, %cst_38 {dimension_numbers = #tpu.dot_dimension_numbers<[1], [0], [0], [1], [0, 0, 1, 1], [], []>} : vector<16x32xf32>, vector<32x32xf32>, vector<16x32xf32> -> vector<16x32xf32>
    %59 = vector.shape_cast %54 : vector<8x16xf32> to vector<1x8x16xf32>
    %60 = vector.shape_cast %56 : vector<16x16xf32> to vector<1x16x16xf32>
    %61 = vector.shape_cast %58 : vector<16x32xf32> to vector<1x16x32xf32>
    "tpu.trace_start"() <{level = 10 : i32, message = "bqd,bkd->bqk"}> : () -> ()
    %cst_39 = arith.constant dense<0.000000e+00> : vector<1x8x16xf32>
    %62 = tpu.matmul %59, %60, %cst_39 {dimension_numbers = #tpu.dot_dimension_numbers<[2], [2], [1], [1], [0, 0, 0, 1, 1, 1], [0], [0]>} : vector<1x8x16xf32>, vector<1x16x16xf32>, vector<1x8x16xf32> -> vector<1x8x16xf32>
    "tpu.trace_stop"() : () -> ()
    %cst_40 = arith.constant 2.500000e-01 : f32
    %63 = vector.broadcast %cst_40 : f32 to vector<1x8x16xf32>
    %64 = arith.mulf %62, %63 : vector<1x8x16xf32>
    %cst_41 = arith.constant dense<0xFF800000> : vector<1x8xf32>
    %65 = vector.multi_reduction <maximumf>, %64, %cst_41 [2] : vector<1x8x16xf32> to vector<1x8xf32>
    %66 = vector.shape_cast %65 : vector<1x8xf32> to vector<1x8x1xf32>
    %67 = vector.broadcast %66 : vector<1x8x1xf32> to vector<1x8x16xf32>
    %68 = arith.subf %64, %67 : vector<1x8x16xf32>
    %69 = math.exp %68 : vector<1x8x16xf32>
    %cst_42 = arith.constant dense<0.000000e+00> : vector<1x8xf32>
    %70 = vector.multi_reduction <add>, %69, %cst_42 [2] : vector<1x8x16xf32> to vector<1x8xf32>
    %71 = vector.shape_cast %70 : vector<1x8xf32> to vector<1x8x1xf32>
    %72 = tpu.reciprocal %71 {approx = true} : vector<1x8x1xf32> -> vector<1x8x1xf32>
    %73 = vector.broadcast %72 : vector<1x8x1xf32> to vector<1x8x16xf32>
    %74 = arith.mulf %69, %73 : vector<1x8x16xf32>
    "tpu.trace_start"() <{level = 10 : i32, message = "bqk,bkd->bqd"}> : () -> ()
    %cst_43 = arith.constant dense<0.000000e+00> : vector<1x8x32xf32>
    %75 = tpu.matmul %74, %61, %cst_43 {dimension_numbers = #tpu.dot_dimension_numbers<[2], [1], [1], [2], [0, 0, 0, 1, 1, 2], [0], [0]>} : vector<1x8x16xf32>, vector<1x16x32xf32>, vector<1x8x32xf32> -> vector<1x8x32xf32>
    "tpu.trace_stop"() : () -> ()
    %76 = vector.shape_cast %75 : vector<1x8x32xf32> to vector<8x32xf32>
    %c0_44 = arith.constant 0 : index
    %c0_45 = arith.constant 0 : index
    %77 = vector.load %arg10[%c0_44, %c0_45] : memref<32x32xf32, #tpu.memory_space<vmem>>, vector<32x32xf32>
    %cst_46 = arith.constant dense<0.000000e+00> : vector<8x32xf32>
    %78 = tpu.matmul %76, %77, %cst_46 {dimension_numbers = #tpu.dot_dimension_numbers<[1], [0], [0], [1], [0, 0, 1, 1], [], []>} : vector<8x32xf32>, vector<32x32xf32>, vector<8x32xf32> -> vector<8x32xf32>
    %79 = arith.addf %78, %52 : vector<8x32xf32>
    %cst_47 = arith.constant dense<0.000000e+00> : vector<8xf32>
    %80 = vector.multi_reduction <add>, %79, %cst_47 [1] : vector<8x32xf32> to vector<8xf32>
    %81 = vector.shape_cast %80 : vector<8xf32> to vector<8x1xf32>
    %cst_48 = arith.constant 3.200000e+01 : f32
    %82 = vector.broadcast %cst_48 : f32 to vector<8x1xf32>
    %83 = arith.divf %81, %82 : vector<8x1xf32>
    %84 = vector.broadcast %83 : vector<8x1xf32> to vector<8x32xf32>
    %85 = arith.subf %79, %84 : vector<8x32xf32>
    %86 = arith.mulf %85, %85 : vector<8x32xf32>
    %cst_49 = arith.constant dense<0.000000e+00> : vector<8xf32>
    %87 = vector.multi_reduction <add>, %86, %cst_49 [1] : vector<8x32xf32> to vector<8xf32>
    %88 = vector.shape_cast %87 : vector<8xf32> to vector<8x1xf32>
    %cst_50 = arith.constant 3.200000e+01 : f32
    %89 = vector.broadcast %cst_50 : f32 to vector<8x1xf32>
    %90 = arith.divf %88, %89 : vector<8x1xf32>
    %cst_51 = arith.constant 9.99999974E-6 : f32
    %91 = vector.broadcast %cst_51 : f32 to vector<8x1xf32>
    %92 = arith.addf %90, %91 : vector<8x1xf32>
    %93 = math.rsqrt %92 : vector<8x1xf32>
    %94 = vector.broadcast %93 : vector<8x1xf32> to vector<8x32xf32>
    %95 = arith.mulf %85, %94 : vector<8x32xf32>
    %c0_52 = arith.constant 0 : index
    %c0_53 = arith.constant 0 : index
    %96 = vector.load %arg17[%c0_52, %c0_53] : memref<1x32xf32, #tpu.memory_space<vmem>>, vector<1x32xf32>
    %97 = vector.broadcast %96 : vector<1x32xf32> to vector<8x32xf32>
    %98 = arith.mulf %95, %97 : vector<8x32xf32>
    %c0_54 = arith.constant 0 : index
    %c0_55 = arith.constant 0 : index
    %99 = vector.load %arg18[%c0_54, %c0_55] : memref<1x32xf32, #tpu.memory_space<vmem>>, vector<1x32xf32>
    %100 = vector.broadcast %99 : vector<1x32xf32> to vector<8x32xf32>
    %101 = arith.addf %98, %100 : vector<8x32xf32>
    %c0_56 = arith.constant 0 : index
    %c0_57 = arith.constant 0 : index
    %102 = vector.load %arg13[%c0_56, %c0_57] : memref<32x32xf32, #tpu.memory_space<vmem>>, vector<32x32xf32>
    %cst_58 = arith.constant dense<0.000000e+00> : vector<8x32xf32>
    %103 = tpu.matmul %101, %102, %cst_58 {dimension_numbers = #tpu.dot_dimension_numbers<[1], [0], [0], [1], [0, 0, 1, 1], [], []>} : vector<8x32xf32>, vector<32x32xf32>, vector<8x32xf32> -> vector<8x32xf32>
    %c0_59 = arith.constant 0 : index
    %c0_60 = arith.constant 0 : index
    %104 = vector.load %arg14[%c0_59, %c0_60] : memref<1x32xf32, #tpu.memory_space<vmem>>, vector<1x32xf32>
    %105 = vector.broadcast %104 : vector<1x32xf32> to vector<8x32xf32>
    %106 = arith.addf %103, %105 : vector<8x32xf32>
    %cst_61 = arith.constant 0.000000e+00 : f32
    %107 = vector.broadcast %cst_61 : f32 to vector<8x32xf32>
    %108 = arith.cmpf ogt, %106, %107 : vector<8x32xf32>
    %cst_62 = arith.constant 0.000000e+00 : f32
    %109 = vector.broadcast %cst_62 : f32 to vector<8x32xf32>
    %110 = arith.minimumf %106, %109 : vector<8x32xf32>
    %111 = math.exp %110 : vector<8x32xf32>
    %cst_63 = arith.constant 1.000000e+00 : f32
    %112 = vector.broadcast %cst_63 : f32 to vector<8x32xf32>
    %113 = arith.subf %111, %112 : vector<8x32xf32>
    %114 = arith.select %108, %106, %113 : vector<8x32xi1>, vector<8x32xf32>
    %c0_64 = arith.constant 0 : index
    %c0_65 = arith.constant 0 : index
    %115 = vector.load %arg11[%c0_64, %c0_65] : memref<32x32xf32, #tpu.memory_space<vmem>>, vector<32x32xf32>
    %cst_66 = arith.constant dense<0.000000e+00> : vector<8x32xf32>
    %116 = tpu.matmul %114, %115, %cst_66 {dimension_numbers = #tpu.dot_dimension_numbers<[1], [0], [0], [1], [0, 0, 1, 1], [], []>} : vector<8x32xf32>, vector<32x32xf32>, vector<8x32xf32> -> vector<8x32xf32>
    %c0_67 = arith.constant 0 : index
    %c0_68 = arith.constant 0 : index
    %117 = vector.load %arg12[%c0_67, %c0_68] : memref<1x32xf32, #tpu.memory_space<vmem>>, vector<1x32xf32>
    %118 = vector.broadcast %117 : vector<1x32xf32> to vector<8x32xf32>
    %119 = arith.addf %116, %118 : vector<8x32xf32>
    %120 = arith.addf %101, %119 : vector<8x32xf32>
    %cst_69 = arith.constant dense<0.000000e+00> : vector<8xf32>
    %121 = vector.multi_reduction <add>, %120, %cst_69 [1] : vector<8x32xf32> to vector<8xf32>
    %122 = vector.shape_cast %121 : vector<8xf32> to vector<8x1xf32>
    %cst_70 = arith.constant 3.200000e+01 : f32
    %123 = vector.broadcast %cst_70 : f32 to vector<8x1xf32>
    %124 = arith.divf %122, %123 : vector<8x1xf32>
    %125 = vector.broadcast %124 : vector<8x1xf32> to vector<8x32xf32>
    %126 = arith.subf %120, %125 : vector<8x32xf32>
    %127 = arith.mulf %126, %126 : vector<8x32xf32>
    %cst_71 = arith.constant dense<0.000000e+00> : vector<8xf32>
    %128 = vector.multi_reduction <add>, %127, %cst_71 [1] : vector<8x32xf32> to vector<8xf32>
    %129 = vector.shape_cast %128 : vector<8xf32> to vector<8x1xf32>
    %cst_72 = arith.constant 3.200000e+01 : f32
    %130 = vector.broadcast %cst_72 : f32 to vector<8x1xf32>
    %131 = arith.divf %129, %130 : vector<8x1xf32>
    %cst_73 = arith.constant 9.99999974E-6 : f32
    %132 = vector.broadcast %cst_73 : f32 to vector<8x1xf32>
    %133 = arith.addf %131, %132 : vector<8x1xf32>
    %134 = math.rsqrt %133 : vector<8x1xf32>
    %135 = vector.broadcast %134 : vector<8x1xf32> to vector<8x32xf32>
    %136 = arith.mulf %126, %135 : vector<8x32xf32>
    %c0_74 = arith.constant 0 : index
    %c0_75 = arith.constant 0 : index
    %137 = vector.load %arg19[%c0_74, %c0_75] : memref<1x32xf32, #tpu.memory_space<vmem>>, vector<1x32xf32>
    %138 = vector.broadcast %137 : vector<1x32xf32> to vector<8x32xf32>
    %139 = arith.mulf %136, %138 : vector<8x32xf32>
    %c0_76 = arith.constant 0 : index
    %c0_77 = arith.constant 0 : index
    %140 = vector.load %arg20[%c0_76, %c0_77] : memref<1x32xf32, #tpu.memory_space<vmem>>, vector<1x32xf32>
    %141 = vector.broadcast %140 : vector<1x32xf32> to vector<8x32xf32>
    %142 = arith.addf %139, %141 : vector<8x32xf32>
    %143 = vector.shape_cast %142 : vector<8x32xf32> to vector<1x8x32xf32>
    %c0_78 = arith.constant 0 : index
    %c0_79 = arith.constant 0 : index
    %c0_80 = arith.constant 0 : index
    %144 = vector.load %arg21[%c0_78, %c0_79, %c0_80] : memref<1x8x32xf32, #tpu.memory_space<vmem>>, vector<1x8x32xf32>
    tpu.vector_store %arg21[%c0_78, %c0_79, %c0_80], %143 {strides = array<i32>} : memref<1x8x32xf32, #tpu.memory_space<vmem>>, vector<1x8x32xf32>,
    return
  }
  func.func @transform_0(%arg0: i32) -> (i32, i32, i32) {
    %c0_i32 = arith.constant 0 : i32
    %c0_i32_0 = arith.constant 0 : i32
    %c0_i32_1 = arith.constant 0 : i32
    return %arg0, %c0_i32, %c0_i32_0 : i32, i32, i32
  }
  func.func @transform_1(%arg0: i32) -> (i32, i32, i32) {
    %c0_i32 = arith.constant 0 : i32
    %c0_i32_0 = arith.constant 0 : i32
    %c0_i32_1 = arith.constant 0 : i32
    return %arg0, %c0_i32, %c0_i32_0 : i32, i32, i32
  }
  func.func @transform_2(%arg0: i32) -> (i32, i32) {
    %c0_i32 = arith.constant 0 : i32
    %c0_i32_0 = arith.constant 0 : i32
    %c0_i32_1 = arith.constant 0 : i32
    return %c0_i32, %c0_i32_0 : i32, i32
  }
  func.func @transform_3(%arg0: i32) -> (i32, i32) {
    %c0_i32 = arith.constant 0 : i32
    %c0_i32_0 = arith.constant 0 : i32
    %c0_i32_1 = arith.constant 0 : i32
    return %c0_i32, %c0_i32_0 : i32, i32
  }
  func.func @transform_4(%arg0: i32) -> (i32, i32) {
    %c0_i32 = arith.constant 0 : i32
    %c0_i32_0 = arith.constant 0 : i32
    %c0_i32_1 = arith.constant 0 : i32
    return %c0_i32, %c0_i32_0 : i32, i32
  }
  func.func @transform_5(%arg0: i32) -> (i32, i32) {
    %c0_i32 = arith.constant 0 : i32
    %c0_i32_0 = arith.constant 0 : i32
    %c0_i32_1 = arith.constant 0 : i32
    return %c0_i32, %c0_i32_0 : i32, i32
  }
  func.func @transform_6(%arg0: i32) -> (i32, i32) {
    %c0_i32 = arith.constant 0 : i32
    %c0_i32_0 = arith.constant 0 : i32
    %c0_i32_1 = arith.constant 0 : i32
    return %c0_i32, %c0_i32_0 : i32, i32
  }
  func.func @transform_7(%arg0: i32) -> (i32, i32) {
    %c0_i32 = arith.constant 0 : i32
    %c0_i32_0 = arith.constant 0 : i32
    %c0_i32_1 = arith.constant 0 : i32
    return %c0_i32, %c0_i32_0 : i32, i32
  }
  func.func @transform_8(%arg0: i32) -> (i32, i32) {
    %c0_i32 = arith.constant 0 : i32
    %c0_i32_0 = arith.constant 0 : i32
    %c0_i32_1 = arith.constant 0 : i32
    return %c0_i32, %c0_i32_0 : i32, i32
  }
  func.func @transform_9(%arg0: i32) -> (i32, i32) {
    %c0_i32 = arith.constant 0 : i32
    %c0_i32_0 = arith.constant 0 : i32
    %c0_i32_1 = arith.constant 0 : i32
    return %c0_i32, %c0_i32_0 : i32, i32
  }
  func.func @transform_10(%arg0: i32) -> (i32, i32) {
    %c0_i32 = arith.constant 0 : i32
    %c0_i32_0 = arith.constant 0 : i32
    %c0_i32_1 = arith.constant 0 : i32
    return %c0_i32, %c0_i32_0 : i32, i32
  }
  func.func @transform_11(%arg0: i32) -> (i32, i32) {
    %c0_i32 = arith.constant 0 : i32
    %c0_i32_0 = arith.constant 0 : i32
    %c0_i32_1 = arith.constant 0 : i32
    return %c0_i32, %c0_i32_0 : i32, i32
  }
  func.func @transform_12(%arg0: i32) -> (i32, i32) {
    %c0_i32 = arith.constant 0 : i32
    %c0_i32_0 = arith.constant 0 : i32
    %c0_i32_1 = arith.constant 0 : i32
    return %c0_i32, %c0_i32_0 : i32, i32
  }
  func.func @transform_13(%arg0: i32) -> (i32, i32) {
    %c0_i32 = arith.constant 0 : i32
    %c0_i32_0 = arith.constant 0 : i32
    %c0_i32_1 = arith.constant 0 : i32
    return %c0_i32, %c0_i32_0 : i32, i32
  }
  func.func @transform_14(%arg0: i32) -> (i32, i32) {
    %c0_i32 = arith.constant 0 : i32
    %c0_i32_0 = arith.constant 0 : i32
    %c0_i32_1 = arith.constant 0 : i32
    return %c0_i32, %c0_i32_0 : i32, i32
  }
  func.func @transform_15(%arg0: i32) -> (i32, i32) {
    %c0_i32 = arith.constant 0 : i32
    %c0_i32_0 = arith.constant 0 : i32
    %c0_i32_1 = arith.constant 0 : i32
    return %c0_i32, %c0_i32_0 : i32, i32
  }
  func.func @transform_16(%arg0: i32) -> (i32, i32) {
    %c0_i32 = arith.constant 0 : i32
    %c0_i32_0 = arith.constant 0 : i32
    %c0_i32_1 = arith.constant 0 : i32
    return %c0_i32, %c0_i32_0 : i32, i32
  }
  func.func @transform_17(%arg0: i32) -> (i32, i32) {
    %c0_i32 = arith.constant 0 : i32
    %c0_i32_0 = arith.constant 0 : i32
    %c0_i32_1 = arith.constant 0 : i32
    return %c0_i32, %c0_i32_0 : i32, i32
  }
  func.func @transform_18(%arg0: i32) -> (i32, i32) {
    %c0_i32 = arith.constant 0 : i32
    %c0_i32_0 = arith.constant 0 : i32
    %c0_i32_1 = arith.constant 0 : i32
    return %c0_i32, %c0_i32_0 : i32, i32
  }
  func.func @transform_19(%arg0: i32) -> (i32, i32) {
    %c0_i32 = arith.constant 0 : i32
    %c0_i32_0 = arith.constant 0 : i32
    %c0_i32_1 = arith.constant 0 : i32
    return %c0_i32, %c0_i32_0 : i32, i32
  }
  func.func @transform_20(%arg0: i32) -> (i32, i32, i32) {
    %c0_i32 = arith.constant 0 : i32
    %c0_i32_0 = arith.constant 0 : i32
    %c0_i32_1 = arith.constant 0 : i32
    return %arg0, %c0_i32, %c0_i32_0 : i32, i32, i32
  }
}

</mosaic_0001>

<llo_original>
// kernel: tpu_custom_call.1
$region0: #{tpu_custom_call.1}
  #allocation0 [shape = 'u32[]', space=smem, size = 0x4, offset = 0x4, fixed_abs, tag = 'smem constant byte address 0x4 - core index']
  #allocation1 [shape = 'u32[144,128]{1,0:T(1,128)}', space=vmem, size = 0x12000, scoped, tag = 'internal scratch']
  %s0 = inlined_call_operand.hbm [shape: f32[2,8,32], index: 0, kind: input, shape index: {}]
  %s1 = inlined_call_operand.vmem [shape: f32[2,16,32], index: 1, kind: input, shape index: {}]
  %s2 = inlined_call_operand.vmem [shape: f32[32,16], index: 2, kind: input, shape index: {}]
  %s3 = inlined_call_operand.vmem [shape: f32[32,16], index: 3, kind: input, shape index: {}]
  %s4 = inlined_call_operand.vmem [shape: f32[32,32], index: 4, kind: input, shape index: {}]
  %s5 = inlined_call_operand.vmem [shape: f32[32,32], index: 5, kind: input, shape index: {}]
  %s6 = inlined_call_operand.vmem [shape: f32[32,16], index: 6, kind: input, shape index: {}]
  %s7 = inlined_call_operand.vmem [shape: f32[32,16], index: 7, kind: input, shape index: {}]
  %s8 = inlined_call_operand.vmem [shape: f32[32,32], index: 8, kind: input, shape index: {}]
  %s9 = inlined_call_operand.vmem [shape: f32[32,32], index: 9, kind: input, shape index: {}]
  %s10 = inlined_call_operand.vmem [shape: f32[32,32], index: 10, kind: input, shape index: {}]
  %s11 = inlined_call_operand.vmem [shape: f32[1,32], index: 11, kind: input, shape index: {}]
  %s12 = inlined_call_operand.vmem [shape: f32[32,32], index: 12, kind: input, shape index: {}]
  %s13 = inlined_call_operand.vmem [shape: f32[1,32], index: 13, kind: input, shape index: {}]
  %s14 = inlined_call_operand.vmem [shape: f32[1,32], index: 14, kind: input, shape index: {}]
  %s15 = inlined_call_operand.vmem [shape: f32[1,32], index: 15, kind: input, shape index: {}]
  %s16 = inlined_call_operand.vmem [shape: f32[1,32], index: 16, kind: input, shape index: {}]
  %s17 = inlined_call_operand.vmem [shape: f32[1,32], index: 17, kind: input, shape index: {}]
  %s18 = inlined_call_operand.vmem [shape: f32[1,32], index: 18, kind: input, shape index: {}]
  %s19 = inlined_call_operand.vmem [shape: f32[1,32], index: 19, kind: input, shape index: {}]
  %s20 = inlined_call_operand.hbm [shape: f32[2,8,32], index: 20, kind: output, shape index: {}]
  %s21 = sld [smem:[#allocation0]]
  $region117: #{tpu_custom_call.1} parent=0
    _
  %s23 = ssub.s32 1, %s21
  %s24 = scalar_select 0, %s23, %s21
  $region1: #{tpu_custom_call.1} parent=0
    #allocation2 [shape = 'u8[8192]{0}', space=vmem, size = 0x2000, scoped, tag = 'input window, operand 0']
    #allocation3 [shape = 's32[2]{0}', space=sflag, size = 0x8, scoped, tag = 'scoped memory for tpu_custom_call.1']
    #allocation4 [shape = 's32[2]{0}', space=sflag, size = 0x8, scoped, tag = 'scoped memory for tpu_custom_call.1']
    #allocation5 [shape = 'u8[8192]{0}', space=vmem, size = 0x2000, scoped, tag = 'output window, operand 0']
    %25 = vsyncpa [#allocation3], 0
    %s26 = scalar_lea.sflag [#allocation3], 1
    %27 = vsyncpa %s26, 0
    %28 = vsyncpa [#allocation4], 0
    %s29 = scalar_lea.sflag [#allocation4], 1
    %30 = vsyncpa %s29, 0
    loop: start=0, step=1, limit=4
    $region2: #{tpu_custom_call.1} parent=1 // loop_pre_header
      _
    $region3: #{tpu_custom_call.1} parent=1 // loop_header
      %s32 = sphi 0, %s36
      %p33 = scmp.ge.s32.totalorder %s32, 4
      %s42 = sphi 0, %s44
      %s45 = sphi 0, %s42
      %s46 = sphi 0, %s45
      %s62 = sphi 0, %s46
      %s68 = sphi 0, %s70
      %s71 = sphi 0, %s68
      %s72 = sphi 0, %s71
      %s88 = sphi 0, %s72
      %s92 = sphi 0, %s92
      %s94 = sphi 0, %s92
      %s95 = sphi 0, %s94
      %s109 = sphi 0, %s95
      %s113 = sphi 0, %s113
      %s115 = sphi 0, %s113
      %s116 = sphi 0, %s115
      %s130 = sphi 0, %s116
      %s134 = sphi 0, %s134
      %s136 = sphi 0, %s134
      %s137 = sphi 0, %s136
      %s151 = sphi 0, %s137
      %s155 = sphi 0, %s155
      %s157 = sphi 0, %s155
      %s158 = sphi 0, %s157
      %s172 = sphi 0, %s158
      %s176 = sphi 0, %s176
      %s178 = sphi 0, %s176
      %s179 = sphi 0, %s178
      %s193 = sphi 0, %s179
      %s197 = sphi 0, %s197
      %s199 = sphi 0, %s197
      %s200 = sphi 0, %s199
      %s214 = sphi 0, %s200
      %s218 = sphi 0, %s218
      %s220 = sphi 0, %s218
      %s221 = sphi 0, %s220
      %s235 = sphi 0, %s221
      %s239 = sphi 0, %s239
      %s241 = sphi 0, %s239
      %s242 = sphi 0, %s241
      %s256 = sphi 0, %s242
      %s260 = sphi 0, %s260
      %s262 = sphi 0, %s260
      %s263 = sphi 0, %s262
      %s277 = sphi 0, %s263
      %s281 = sphi 0, %s281
      %s283 = sphi 0, %s281
      %s284 = sphi 0, %s283
      %s298 = sphi 0, %s284
      %s302 = sphi 0, %s302
      %s304 = sphi 0, %s302
      %s305 = sphi 0, %s304
      %s319 = sphi 0, %s305
      %s323 = sphi 0, %s323
      %s325 = sphi 0, %s323
      %s326 = sphi 0, %s325
      %s340 = sphi 0, %s326
      %s344 = sphi 0, %s344
      %s346 = sphi 0, %s344
      %s347 = sphi 0, %s346
      %s361 = sphi 0, %s347
      %s365 = sphi 0, %s365
      %s367 = sphi 0, %s365
      %s368 = sphi 0, %s367
      %s382 = sphi 0, %s368
      %s386 = sphi 0, %s386
      %s388 = sphi 0, %s386
      %s389 = sphi 0, %s388
      %s403 = sphi 0, %s389
      %s407 = sphi 0, %s407
      %s409 = sphi 0, %s407
      %s410 = sphi 0, %s409
      %s424 = sphi 0, %s410
      %s428 = sphi 0, %s428
      %s430 = sphi 0, %s428
      %s431 = sphi 0, %s430
      %s445 = sphi 0, %s431
      %s449 = sphi 0, %s449
      %s451 = sphi 0, %s449
      %s452 = sphi 0, %s451
      %s466 = sphi 0, %s452
      %s472 = sphi 0, %s474
      %s475 = sphi 0, %s472
      %s476 = sphi 0, %s475
      %s492 = sphi 0, %s476
    $region4: #{tpu_custom_call.1} parent=1 // loop_header_branch
      %35 = sbr.rel (%p33) target = $region8
    $region5: #{tpu_custom_call.1} parent=1 // loop_body
      %s37 = ssub.s32 %s32, 1
      %s38 = ssub.s32 %s32, 2
      %s39 = sadd.s32 %s32, 1
      %s40 = ssub.s32 %s32, %s39
      %p41 = scmp.eq.s32.totalorder %s40, 0
      %s43 = sadd.s32 %s42, 1
      %s44 = scalar_select %p41, %s42, %s43
      %p47 = pneg %p41
      %p48 = scmp.eq.s32.totalorder %s32, 1
      %p49 = por %p47, %p48
      %p50 = scmp.ne.s32.totalorder %s42, %s45
      %p51 = scmp.eq.s32.totalorder %s32, 0
      %p52 = por %p50, %p51
      %p53 = scmp.ne.s32.totalorder %s42, %s45
      %p54 = scmp.eq.s32.totalorder %s37, 1
      %p55 = por %p53, %p54
      %p56 = scmp.ne.s32.totalorder %s45, %s46
      %p57 = scmp.eq.s32.totalorder %s37, 0
      %p58 = por %p56, %p57
      %p59 = scmp.ne.s32.totalorder %s45, %s46
      %p60 = scmp.eq.s32.totalorder %s38, 1
      %p61 = por %p59, %p60
      %p63 = scmp.ne.s32.totalorder %s46, %s62
      %p64 = scmp.eq.s32.totalorder %s38, 0
      %p65 = por %p63, %p64
      %s66 = ssub.s32 %s32, %s39
      %p67 = scmp.eq.s32.totalorder %s66, 0
      %s69 = sadd.s32 %s68, 1
      %s70 = scalar_select %p67, %s68, %s69
      %p73 = pneg %p67
      %p74 = scmp.eq.s32.totalorder %s32, 1
      %p75 = por %p73, %p74
      %p76 = scmp.ne.s32.totalorder %s68, %s71
      %p77 = scmp.eq.s32.totalorder %s32, 0
      %p78 = por %p76, %p77
      %p79 = scmp.ne.s32.totalorder %s68, %s71
      %p80 = scmp.eq.s32.totalorder %s37, 1
      %p81 = por %p79, %p80
      %p82 = scmp.ne.s32.totalorder %s71, %s72
      %p83 = scmp.eq.s32.totalorder %s37, 0
      %p84 = por %p82, %p83
      %p85 = scmp.ne.s32.totalorder %s71, %s72
      %p86 = scmp.eq.s32.totalorder %s38, 1
      %p87 = por %p85, %p86
      %p89 = scmp.ne.s32.totalorder %s72, %s88
      %p90 = scmp.eq.s32.totalorder %s38, 0
      %p91 = por %p89, %p90
      %s93 = sadd.s32 %s92, 1
      %p96 = scmp.eq.s32.totalorder %s32, 1
      %p97 = scmp.ne.s32.totalorder %s92, %s94
      %p98 = scmp.eq.s32.totalorder %s32, 0
      %p99 = por %p97, %p98
      %p100 = scmp.ne.s32.totalorder %s92, %s94
      %p101 = scmp.eq.s32.totalorder %s37, 1
      %p102 = por %p100, %p101
      %p103 = scmp.ne.s32.totalorder %s94, %s95
      %p104 = scmp.eq.s32.totalorder %s37, 0
      %p105 = por %p103, %p104
      %p106 = scmp.ne.s32.totalorder %s94, %s95
      %p107 = scmp.eq.s32.totalorder %s38, 1
      %p108 = por %p106, %p107
      %p110 = scmp.ne.s32.totalorder %s95, %s109
      %p111 = scmp.eq.s32.totalorder %s38, 0
      %p112 = por %p110, %p111
      %s114 = sadd.s32 %s113, 1
      %p117 = scmp.eq.s32.totalorder %s32, 1
      %p118 = scmp.ne.s32.totalorder %s113, %s115
      %p119 = scmp.eq.s32.totalorder %s32, 0
      %p120 = por %p118, %p119
      %p121 = scmp.ne.s32.totalorder %s113, %s115
      %p122 = scmp.eq.s32.totalorder %s37, 1
      %p123 = por %p121, %p122
      %p124 = scmp.ne.s32.totalorder %s115, %s116
      %p125 = scmp.eq.s32.totalorder %s37, 0
      %p126 = por %p124, %p125
      %p127 = scmp.ne.s32.totalorder %s115, %s116
      %p128 = scmp.eq.s32.totalorder %s38, 1
      %p129 = por %p127, %p128
      %p131 = scmp.ne.s32.totalorder %s116, %s130
      %p132 = scmp.eq.s32.totalorder %s38, 0
      %p133 = por %p131, %p132
      %s135 = sadd.s32 %s134, 1
      %p138 = scmp.eq.s32.totalorder %s32, 1
      %p139 = scmp.ne.s32.totalorder %s134, %s136
      %p140 = scmp.eq.s32.totalorder %s32, 0
      %p141 = por %p139, %p140
      %p142 = scmp.ne.s32.totalorder %s134, %s136
      %p143 = scmp.eq.s32.totalorder %s37, 1
      %p144 = por %p142, %p143
      %p145 = scmp.ne.s32.totalorder %s136, %s137
      %p146 = scmp.eq.s32.totalorder %s37, 0
      %p147 = por %p145, %p146
      %p148 = scmp.ne.s32.totalorder %s136, %s137
      %p149 = scmp.eq.s32.totalorder %s38, 1
      %p150 = por %p148, %p149
      %p152 = scmp.ne.s32.totalorder %s137, %s151
      %p153 = scmp.eq.s32.totalorder %s38, 0
      %p154 = por %p152, %p153
      %s156 = sadd.s32 %s155, 1
      %p159 = scmp.eq.s32.totalorder %s32, 1
      %p160 = scmp.ne.s32.totalorder %s155, %s157
      %p161 = scmp.eq.s32.totalorder %s32, 0
      %p162 = por %p160, %p161
      %p163 = scmp.ne.s32.totalorder %s155, %s157
      %p164 = scmp.eq.s32.totalorder %s37, 1
      %p165 = por %p163, %p164
      %p166 = scmp.ne.s32.totalorder %s157, %s158
      %p167 = scmp.eq.s32.totalorder %s37, 0
      %p168 = por %p166, %p167
      %p169 = scmp.ne.s32.totalorder %s157, %s158
      %p170 = scmp.eq.s32.totalorder %s38, 1
      %p171 = por %p169, %p170
      %p173 = scmp.ne.s32.totalorder %s158, %s172
      %p174 = scmp.eq.s32.totalorder %s38, 0
      %p175 = por %p173, %p174
      %s177 = sadd.s32 %s176, 1
      %p180 = scmp.eq.s32.totalorder %s32, 1
      %p181 = scmp.ne.s32.totalorder %s176, %s178
      %p182 = scmp.eq.s32.totalorder %s32, 0
      %p183 = por %p181, %p182
      %p184 = scmp.ne.s32.totalorder %s176, %s178
      %p185 = scmp.eq.s32.totalorder %s37, 1
      %p186 = por %p184, %p185
      %p187 = scmp.ne.s32.totalorder %s178, %s179
      %p188 = scmp.eq.s32.totalorder %s37, 0
      %p189 = por %p187, %p188
      %p190 = scmp.ne.s32.totalorder %s178, %s179
      %p191 = scmp.eq.s32.totalorder %s38, 1
      %p192 = por %p190, %p191
      %p194 = scmp.ne.s32.totalorder %s179, %s193
      %p195 = scmp.eq.s32.totalorder %s38, 0
      %p196 = por %p194, %p195
      %s198 = sadd.s32 %s197, 1
      %p201 = scmp.eq.s32.totalorder %s32, 1
      %p202 = scmp.ne.s32.totalorder %s197, %s199
      %p203 = scmp.eq.s32.totalorder %s32, 0
      %p204 = por %p202, %p203
      %p205 = scmp.ne.s32.totalorder %s197, %s199
      %p206 = scmp.eq.s32.totalorder %s37, 1
      %p207 = por %p205, %p206
      %p208 = scmp.ne.s32.totalorder %s199, %s200
      %p209 = scmp.eq.s32.totalorder %s37, 0
      %p210 = por %p208, %p209
      %p211 = scmp.ne.s32.totalorder %s199, %s200
      %p212 = scmp.eq.s32.totalorder %s38, 1
      %p213 = por %p211, %p212
      %p215 = scmp.ne.s32.totalorder %s200, %s214
      %p216 = scmp.eq.s32.totalorder %s38, 0
      %p217 = por %p215, %p216
      %s219 = sadd.s32 %s218, 1
      %p222 = scmp.eq.s32.totalorder %s32, 1
      %p223 = scmp.ne.s32.totalorder %s218, %s220
      %p224 = scmp.eq.s32.totalorder %s32, 0
      %p225 = por %p223, %p224
      %p226 = scmp.ne.s32.totalorder %s218, %s220
      %p227 = scmp.eq.s32.totalorder %s37, 1
      %p228 = por %p226, %p227
      %p229 = scmp.ne.s32.totalorder %s220, %s221
      %p230 = scmp.eq.s32.totalorder %s37, 0
      %p231 = por %p229, %p230
      %p232 = scmp.ne.s32.totalorder %s220, %s221
      %p233 = scmp.eq.s32.totalorder %s38, 1
      %p234 = por %p232, %p233
      %p236 = scmp.ne.s32.totalorder %s221, %s235
      %p237 = scmp.eq.s32.totalorder %s38, 0
      %p238 = por %p236, %p237
      %s240 = sadd.s32 %s239, 1
      %p243 = scmp.eq.s32.totalorder %s32, 1
      %p244 = scmp.ne.s32.totalorder %s239, %s241
      %p245 = scmp.eq.s32.totalorder %s32, 0
      %p246 = por %p244, %p245
      %p247 = scmp.ne.s32.totalorder %s239, %s241
      %p248 = scmp.eq.s32.totalorder %s37, 1
      %p249 = por %p247, %p248
      %p250 = scmp.ne.s32.totalorder %s241, %s242
      %p251 = scmp.eq.s32.totalorder %s37, 0
      %p252 = por %p250, %p251
      %p253 = scmp.ne.s32.totalorder %s241, %s242
      %p254 = scmp.eq.s32.totalorder %s38, 1
      %p255 = por %p253, %p254
      %p257 = scmp.ne.s32.totalorder %s242, %s256
      %p258 = scmp.eq.s32.totalorder %s38, 0
      %p259 = por %p257, %p258
      %s261 = sadd.s32 %s260, 1
      %p264 = scmp.eq.s32.totalorder %s32, 1
      %p265 = scmp.ne.s32.totalorder %s260, %s262
      %p266 = scmp.eq.s32.totalorder %s32, 0
      %p267 = por %p265, %p266
      %p268 = scmp.ne.s32.totalorder %s260, %s262
      %p269 = scmp.eq.s32.totalorder %s37, 1
      %p270 = por %p268, %p269
      %p271 = scmp.ne.s32.totalorder %s262, %s263
      %p272 = scmp.eq.s32.totalorder %s37, 0
      %p273 = por %p271, %p272
      %p274 = scmp.ne.s32.totalorder %s262, %s263
      %p275 = scmp.eq.s32.totalorder %s38, 1
      %p276 = por %p274, %p275
      %p278 = scmp.ne.s32.totalorder %s263, %s277
      %p279 = scmp.eq.s32.totalorder %s38, 0
      %p280 = por %p278, %p279
      %s282 = sadd.s32 %s281, 1
      %p285 = scmp.eq.s32.totalorder %s32, 1
      %p286 = scmp.ne.s32.totalorder %s281, %s283
      %p287 = scmp.eq.s32.totalorder %s32, 0
      %p288 = por %p286, %p287
      %p289 = scmp.ne.s32.totalorder %s281, %s283
      %p290 = scmp.eq.s32.totalorder %s37, 1
      %p291 = por %p289, %p290
      %p292 = scmp.ne.s32.totalorder %s283, %s284
      %p293 = scmp.eq.s32.totalorder %s37, 0
      %p294 = por %p292, %p293
      %p295 = scmp.ne.s32.totalorder %s283, %s284
      %p296 = scmp.eq.s32.totalorder %s38, 1
      %p297 = por %p295, %p296
      %p299 = scmp.ne.s32.totalorder %s284, %s298
      %p300 = scmp.eq.s32.totalorder %s38, 0
      %p301 = por %p299, %p300
      %s303 = sadd.s32 %s302, 1
      %p306 = scmp.eq.s32.totalorder %s32, 1
      %p307 = scmp.ne.s32.totalorder %s302, %s304
      %p308 = scmp.eq.s32.totalorder %s32, 0
      %p309 = por %p307, %p308
      %p310 = scmp.ne.s32.totalorder %s302, %s304
      %p311 = scmp.eq.s32.totalorder %s37, 1
      %p312 = por %p310, %p311
      %p313 = scmp.ne.s32.totalorder %s304, %s305
      %p314 = scmp.eq.s32.totalorder %s37, 0
      %p315 = por %p313, %p314
      %p316 = scmp.ne.s32.totalorder %s304, %s305
      %p317 = scmp.eq.s32.totalorder %s38, 1
      %p318 = por %p316, %p317
      %p320 = scmp.ne.s32.totalorder %s305, %s319
      %p321 = scmp.eq.s32.totalorder %s38, 0
      %p322 = por %p320, %p321
      %s324 = sadd.s32 %s323, 1
      %p327 = scmp.eq.s32.totalorder %s32, 1
      %p328 = scmp.ne.s32.totalorder %s323, %s325
      %p329 = scmp.eq.s32.totalorder %s32, 0
      %p330 = por %p328, %p329
      %p331 = scmp.ne.s32.totalorder %s323, %s325
      %p332 = scmp.eq.s32.totalorder %s37, 1
      %p333 = por %p331, %p332
      %p334 = scmp.ne.s32.totalorder %s325, %s326
      %p335 = scmp.eq.s32.totalorder %s37, 0
      %p336 = por %p334, %p335
      %p337 = scmp.ne.s32.totalorder %s325, %s326
      %p338 = scmp.eq.s32.totalorder %s38, 1
      %p339 = por %p337, %p338
      %p341 = scmp.ne.s32.totalorder %s326, %s340
      %p342 = scmp.eq.s32.totalorder %s38, 0
      %p343 = por %p341, %p342
      %s345 = sadd.s32 %s344, 1
      %p348 = scmp.eq.s32.totalorder %s32, 1
      %p349 = scmp.ne.s32.totalorder %s344, %s346
      %p350 = scmp.eq.s32.totalorder %s32, 0
      %p351 = por %p349, %p350
      %p352 = scmp.ne.s32.totalorder %s344, %s346
      %p353 = scmp.eq.s32.totalorder %s37, 1
      %p354 = por %p352, %p353
      %p355 = scmp.ne.s32.totalorder %s346, %s347
      %p356 = scmp.eq.s32.totalorder %s37, 0
      %p357 = por %p355, %p356
      %p358 = scmp.ne.s32.totalorder %s346, %s347
      %p359 = scmp.eq.s32.totalorder %s38, 1
      %p360 = por %p358, %p359
      %p362 = scmp.ne.s32.totalorder %s347, %s361
      %p363 = scmp.eq.s32.totalorder %s38, 0
      %p364 = por %p362, %p363
      %s366 = sadd.s32 %s365, 1
      %p369 = scmp.eq.s32.totalorder %s32, 1
      %p370 = scmp.ne.s32.totalorder %s365, %s367
      %p371 = scmp.eq.s32.totalorder %s32, 0
      %p372 = por %p370, %p371
      %p373 = scmp.ne.s32.totalorder %s365, %s367
      %p374 = scmp.eq.s32.totalorder %s37, 1
      %p375 = por %p373, %p374
      %p376 = scmp.ne.s32.totalorder %s367, %s368
      %p377 = scmp.eq.s32.totalorder %s37, 0
      %p378 = por %p376, %p377
      %p379 = scmp.ne.s32.totalorder %s367, %s368
      %p380 = scmp.eq.s32.totalorder %s38, 1
      %p381 = por %p379, %p380
      %p383 = scmp.ne.s32.totalorder %s368, %s382
      %p384 = scmp.eq.s32.totalorder %s38, 0
      %p385 = por %p383, %p384
      %s387 = sadd.s32 %s386, 1
      %p390 = scmp.eq.s32.totalorder %s32, 1
      %p391 = scmp.ne.s32.totalorder %s386, %s388
      %p392 = scmp.eq.s32.totalorder %s32, 0
      %p393 = por %p391, %p392
      %p394 = scmp.ne.s32.totalorder %s386, %s388
      %p395 = scmp.eq.s32.totalorder %s37, 1
      %p396 = por %p394, %p395
      %p397 = scmp.ne.s32.totalorder %s388, %s389
      %p398 = scmp.eq.s32.totalorder %s37, 0
      %p399 = por %p397, %p398
      %p400 = scmp.ne.s32.totalorder %s388, %s389
      %p401 = scmp.eq.s32.totalorder %s38, 1
      %p402 = por %p400, %p401
      %p404 = scmp.ne.s32.totalorder %s389, %s403
      %p405 = scmp.eq.s32.totalorder %s38, 0
      %p406 = por %p404, %p405
      %s408 = sadd.s32 %s407, 1
      %p411 = scmp.eq.s32.totalorder %s32, 1
      %p412 = scmp.ne.s32.totalorder %s407, %s409
      %p413 = scmp.eq.s32.totalorder %s32, 0
      %p414 = por %p412, %p413
      %p415 = scmp.ne.s32.totalorder %s407, %s409
      %p416 = scmp.eq.s32.totalorder %s37, 1
      %p417 = por %p415, %p416
      %p418 = scmp.ne.s32.totalorder %s409, %s410
      %p419 = scmp.eq.s32.totalorder %s37, 0
      %p420 = por %p418, %p419
      %p421 = scmp.ne.s32.totalorder %s409, %s410
      %p422 = scmp.eq.s32.totalorder %s38, 1
      %p423 = por %p421, %p422
      %p425 = scmp.ne.s32.totalorder %s410, %s424
      %p426 = scmp.eq.s32.totalorder %s38, 0
      %p427 = por %p425, %p426
      %s429 = sadd.s32 %s428, 1
      %p432 = scmp.eq.s32.totalorder %s32, 1
      %p433 = scmp.ne.s32.totalorder %s428, %s430
      %p434 = scmp.eq.s32.totalorder %s32, 0
      %p435 = por %p433, %p434
      %p436 = scmp.ne.s32.totalorder %s428, %s430
      %p437 = scmp.eq.s32.totalorder %s37, 1
      %p438 = por %p436, %p437
      %p439 = scmp.ne.s32.totalorder %s430, %s431
      %p440 = scmp.eq.s32.totalorder %s37, 0
      %p441 = por %p439, %p440
      %p442 = scmp.ne.s32.totalorder %s430, %s431
      %p443 = scmp.eq.s32.totalorder %s38, 1
      %p444 = por %p442, %p443
      %p446 = scmp.ne.s32.totalorder %s431, %s445
      %p447 = scmp.eq.s32.totalorder %s38, 0
      %p448 = por %p446, %p447
      %s450 = sadd.s32 %s449, 1
      %p453 = scmp.eq.s32.totalorder %s32, 1
      %p454 = scmp.ne.s32.totalorder %s449, %s451
      %p455 = scmp.eq.s32.totalorder %s32, 0
      %p456 = por %p454, %p455
      %p457 = scmp.ne.s32.totalorder %s449, %s451
      %p458 = scmp.eq.s32.totalorder %s37, 1
      %p459 = por %p457, %p458
      %p460 = scmp.ne.s32.totalorder %s451, %s452
      %p461 = scmp.eq.s32.totalorder %s37, 0
      %p462 = por %p460, %p461
      %p463 = scmp.ne.s32.totalorder %s451, %s452
      %p464 = scmp.eq.s32.totalorder %s38, 1
      %p465 = por %p463, %p464
      %p467 = scmp.ne.s32.totalorder %s452, %s466
      %p468 = scmp.eq.s32.totalorder %s38, 0
      %p469 = por %p467, %p468
      %s470 = ssub.s32 %s32, %s39
      %p471 = scmp.eq.s32.totalorder %s470, 0
      %s473 = sadd.s32 %s472, 1
      %s474 = scalar_select %p471, %s472, %s473
      %p477 = pneg %p471
      %p478 = scmp.eq.s32.totalorder %s32, 1
      %p479 = por %p477, %p478
      %p480 = scmp.ne.s32.totalorder %s472, %s475
      %p481 = scmp.eq.s32.totalorder %s32, 0
      %p482 = por %p480, %p481
      %p483 = scmp.ne.s32.totalorder %s472, %s475
      %p484 = scmp.eq.s32.totalorder %s37, 1
      %p485 = por %p483, %p484
      %p486 = scmp.ne.s32.totalorder %s475, %s476
      %p487 = scmp.eq.s32.totalorder %s37, 0
      %p488 = por %p486, %p487
      %p489 = scmp.ne.s32.totalorder %s475, %s476
      %p490 = scmp.eq.s32.totalorder %s38, 1
      %p491 = por %p489, %p490
      %p493 = scmp.ne.s32.totalorder %s476, %s492
      %p494 = scmp.eq.s32.totalorder %s38, 0
      %p495 = por %p493, %p494
      %p496 = scmp.le.s32.totalorder 1, %s32
      %p497 = scmp.lt.s32.totalorder %s32, 3
      %p498 = pnand %p496, %p497
      %p499 = pneg %p498
      // Predicated region
      $region9: #{tpu_custom_call.1} parent=5 // pred_check
        _
      $region10: #{tpu_custom_call.1} parent=5 // pred_check_branch
        %501 = sbr.rel (%p498) target = $region12
      $region11: #{tpu_custom_call.1} parent=5 // pred_region
        %s502 = ssub.s32 %s32, 1
        // Predicated region
        $region13: #{tpu_custom_call.1} parent=11 // pred_check
          %p503 = pneg %p105
        $region14: #{tpu_custom_call.1} parent=11 // pred_check_branch
          %505 = sbr.rel (%p503) target = $region16
        $region15: #{tpu_custom_call.1} parent=11 // pred_region
          _
        $region16: #{tpu_custom_call.1} parent=11 // pred_fallthru
          _
        // Predicated region
        $region17: #{tpu_custom_call.1} parent=11 // pred_check
          %p506 = pneg %p126
        $region18: #{tpu_custom_call.1} parent=11 // pred_check_branch
          %508 = sbr.rel (%p506) target = $region20
        $region19: #{tpu_custom_call.1} parent=11 // pred_region
          _
        $region20: #{tpu_custom_call.1} parent=11 // pred_fallthru
          _
        // Predicated region
        $region21: #{tpu_custom_call.1} parent=11 // pred_check
          %p509 = pneg %p147
        $region22: #{tpu_custom_call.1} parent=11 // pred_check_branch
          %511 = sbr.rel (%p509) target = $region24
        $region23: #{tpu_custom_call.1} parent=11 // pred_region
          _
        $region24: #{tpu_custom_call.1} parent=11 // pred_fallthru
          _
        // Predicated region
        $region25: #{tpu_custom_call.1} parent=11 // pred_check
          %p512 = pneg %p168
        $region26: #{tpu_custom_call.1} parent=11 // pred_check_branch
          %514 = sbr.rel (%p512) target = $region28
        $region27: #{tpu_custom_call.1} parent=11 // pred_region
          _
        $region28: #{tpu_custom_call.1} parent=11 // pred_fallthru
          _
        // Predicated region
        $region29: #{tpu_custom_call.1} parent=11 // pred_check
          %p515 = pneg %p189
        $region30: #{tpu_custom_call.1} parent=11 // pred_check_branch
          %517 = sbr.rel (%p515) target = $region32
        $region31: #{tpu_custom_call.1} parent=11 // pred_region
          _
        $region32: #{tpu_custom_call.1} parent=11 // pred_fallthru
          _
        // Predicated region
        $region33: #{tpu_custom_call.1} parent=11 // pred_check
          %p518 = pneg %p210
        $region34: #{tpu_custom_call.1} parent=11 // pred_check_branch
          %520 = sbr.rel (%p518) target = $region36
        $region35: #{tpu_custom_call.1} parent=11 // pred_region
          _
        $region36: #{tpu_custom_call.1} parent=11 // pred_fallthru
          _
        // Predicated region
        $region37: #{tpu_custom_call.1} parent=11 // pred_check
          %p521 = pneg %p231
        $region38: #{tpu_custom_call.1} parent=11 // pred_check_branch
          %523 = sbr.rel (%p521) target = $region40
        $region39: #{tpu_custom_call.1} parent=11 // pred_region
          _
        $region40: #{tpu_custom_call.1} parent=11 // pred_fallthru
          _
        // Predicated region
        $region41: #{tpu_custom_call.1} parent=11 // pred_check
          %p524 = pneg %p252
        $region42: #{tpu_custom_call.1} parent=11 // pred_check_branch
          %526 = sbr.rel (%p524) target = $region44
        $region43: #{tpu_custom_call.1} parent=11 // pred_region
          _
        $region44: #{tpu_custom_call.1} parent=11 // pred_fallthru
          _
        // Predicated region
        $region45: #{tpu_custom_call.1} parent=11 // pred_check
          %p527 = pneg %p273
        $region46: #{tpu_custom_call.1} parent=11 // pred_check_branch
          %529 = sbr.rel (%p527) target = $region48
        $region47: #{tpu_custom_call.1} parent=11 // pred_region
          _
        $region48: #{tpu_custom_call.1} parent=11 // pred_fallthru
          _
        // Predicated region
        $region49: #{tpu_custom_call.1} parent=11 // pred_check
          %p530 = pneg %p294
        $region50: #{tpu_custom_call.1} parent=11 // pred_check_branch
          %532 = sbr.rel (%p530) target = $region52
        $region51: #{tpu_custom_call.1} parent=11 // pred_region
          _
        $region52: #{tpu_custom_call.1} parent=11 // pred_fallthru
          _
        // Predicated region
        $region53: #{tpu_custom_call.1} parent=11 // pred_check
          %p533 = pneg %p315
        $region54: #{tpu_custom_call.1} parent=11 // pred_check_branch
          %535 = sbr.rel (%p533) target = $region56
        $region55: #{tpu_custom_call.1} parent=11 // pred_region
          _
        $region56: #{tpu_custom_call.1} parent=11 // pred_fallthru
          _
        // Predicated region
        $region57: #{tpu_custom_call.1} parent=11 // pred_check
          %p536 = pneg %p336
        $region58: #{tpu_custom_call.1} parent=11 // pred_check_branch
          %538 = sbr.rel (%p536) target = $region60
        $region59: #{tpu_custom_call.1} parent=11 // pred_region
          _
        $region60: #{tpu_custom_call.1} parent=11 // pred_fallthru
          _
        // Predicated region
        $region61: #{tpu_custom_call.1} parent=11 // pred_check
          %p539 = pneg %p357
        $region62: #{tpu_custom_call.1} parent=11 // pred_check_branch
          %541 = sbr.rel (%p539) target = $region64
        $region63: #{tpu_custom_call.1} parent=11 // pred_region
          _
        $region64: #{tpu_custom_call.1} parent=11 // pred_fallthru
          _
        // Predicated region
        $region65: #{tpu_custom_call.1} parent=11 // pred_check
          %p542 = pneg %p378
        $region66: #{tpu_custom_call.1} parent=11 // pred_check_branch
          %544 = sbr.rel (%p542) target = $region68
        $region67: #{tpu_custom_call.1} parent=11 // pred_region
          _
        $region68: #{tpu_custom_call.1} parent=11 // pred_fallthru
          _
        // Predicated region
        $region69: #{tpu_custom_call.1} parent=11 // pred_check
          %p545 = pneg %p399
        $region70: #{tpu_custom_call.1} parent=11 // pred_check_branch
          %547 = sbr.rel (%p545) target = $region72
        $region71: #{tpu_custom_call.1} parent=11 // pred_region
          _
        $region72: #{tpu_custom_call.1} parent=11 // pred_fallthru
          _
        // Predicated region
        $region73: #{tpu_custom_call.1} parent=11 // pred_check
          %p548 = pneg %p420
        $region74: #{tpu_custom_call.1} parent=11 // pred_check_branch
          %550 = sbr.rel (%p548) target = $region76
        $region75: #{tpu_custom_call.1} parent=11 // pred_region
          _
        $region76: #{tpu_custom_call.1} parent=11 // pred_fallthru
          _
        // Predicated region
        $region77: #{tpu_custom_call.1} parent=11 // pred_check
          %p551 = pneg %p441
        $region78: #{tpu_custom_call.1} parent=11 // pred_check_branch
          %553 = sbr.rel (%p551) target = $region80
        $region79: #{tpu_custom_call.1} parent=11 // pred_region
          _
        $region80: #{tpu_custom_call.1} parent=11 // pred_fallthru
          _
        // Predicated region
        $region81: #{tpu_custom_call.1} parent=11 // pred_check
          %p554 = pneg %p462
        $region82: #{tpu_custom_call.1} parent=11 // pred_check_branch
          %556 = sbr.rel (%p554) target = $region84
        $region83: #{tpu_custom_call.1} parent=11 // pred_region
          _
        $region84: #{tpu_custom_call.1} parent=11 // pred_fallthru
          _
      $region12: #{tpu_custom_call.1} parent=5 // pred_fallthru
        _
      %p557 = scmp.lt.s32.totalorder %s32, 2
      // Predicated region
      $region85: #{tpu_custom_call.1} parent=5 // pred_check
        %p558 = pneg %p557
      $region86: #{tpu_custom_call.1} parent=5 // pred_check_branch
        %560 = sbr.rel (%p558) target = $region88
      $region87: #{tpu_custom_call.1} parent=5 // pred_region
        // Predicated region
        $region89: #{tpu_custom_call.1} parent=87 // pred_check
          %p561 = pneg %p52
        $region90: #{tpu_custom_call.1} parent=87 // pred_check_branch
          %563 = sbr.rel (%p561) target = $region92
        $region91: #{tpu_custom_call.1} parent=87 // pred_region
          %s564 = sand.u32 %s42, 1
          %s565 = scalar_lea.sflag [#allocation3], %s564
          %s566 = sand.u32 %s42, 1
          %s567 = smul.addr %s566, 8
          %s568 = scalar_lea.vmem [#allocation2], %s567
          %s570 = ssub.s32 128, 128
          %571 = vsyncadd %s565, %s570
          %s572 = smul.addr %s32, 128
          %s573 = scalar_lea.hbm %s0, %s572
          %s575 = sshll.u32 %s568, 4
          %s576 = int_to_ptr.vmem [resolvable:$true] %s575
          %578 = dma.hbm_to_vmem [thread:$0]  %s573, 128, %s576, %s565
        $region92: #{tpu_custom_call.1} parent=87 // pred_fallthru
          _
        // Predicated region
        $region93: #{tpu_custom_call.1} parent=87 // pred_check
          %p579 = pneg %p78
        $region94: #{tpu_custom_call.1} parent=87 // pred_check_branch
          %581 = sbr.rel (%p579) target = $region96
        $region95: #{tpu_custom_call.1} parent=87 // pred_region
          %p582 = scmp.lt.s32.totalorder %s32, 1
          %s583 = scalar_select %p582, %s32, 1
          %s584 = smul.addr %s583, 2
          %s585 = smul.addr %s584, 8
          %s586 = scalar_lea.vmem %s1, %s585
        $region96: #{tpu_custom_call.1} parent=87 // pred_fallthru
          _
      $region88: #{tpu_custom_call.1} parent=5 // pred_fallthru
        _
      %p587 = scmp.le.s32.totalorder 1, %s32
      %p588 = scmp.lt.s32.totalorder %s32, 3
      %p589 = pnand %p587, %p588
      %p590 = pneg %p589
      // Predicated region
      $region97: #{tpu_custom_call.1} parent=5 // pred_check
        _
      $region98: #{tpu_custom_call.1} parent=5 // pred_check_branch
        %592 = sbr.rel (%p589) target = $region100
      $region99: #{tpu_custom_call.1} parent=5 // pred_region
        %s593 = ssub.s32 %s32, 1
        %s594 = sand.u32 %s45, 1
        %s595 = scalar_lea.sflag [#allocation3], %s594
        %s596 = sand.u32 %s45, 1
        %s597 = smul.addr %s596, 8
        %s598 = scalar_lea.vmem [#allocation2], %s597
        // Predicated region
        $region101: #{tpu_custom_call.1} parent=99 // pred_check
          %p599 = pneg %p58
        $region102: #{tpu_custom_call.1} parent=99 // pred_check_branch
          %601 = sbr.rel (%p599) target = $region104
        $region103: #{tpu_custom_call.1} parent=99 // pred_region
          %602 = dma.done %s595, 128
        $region104: #{tpu_custom_call.1} parent=99 // pred_fallthru
          _
        %s603 = sand.u32 %s45, 1
        %s604 = scalar_lea.sflag [#allocation3], %s603
        %s605 = sand.u32 %s45, 1
        %s606 = smul.addr %s605, 8
        %s607 = scalar_lea.vmem [#allocation2], %s606
        %p608 = pneg %p58
        %p609 = pneg %p55
        %p610 = scmp.lt.s32.totalorder %s37, 1
        %s611 = scalar_select %p610, %s37, 1
        %s612 = smul.addr %s611, 2
        %s613 = smul.addr %s612, 8
        %s614 = scalar_lea.vmem %s1, %s613
        %p615 = pneg %p84
        %p616 = pneg %p81
        %p617 = pneg %p105
        %p618 = pneg %p102
        %p619 = pneg %p126
        %p620 = pneg %p123
        %p621 = pneg %p147
        %p622 = pneg %p144
        %p623 = pneg %p168
        %p624 = pneg %p165
        %p625 = pneg %p189
        %p626 = pneg %p186
        %p627 = pneg %p210
        %p628 = pneg %p207
        %p629 = pneg %p231
        %p630 = pneg %p228
        %p631 = pneg %p252
        %p632 = pneg %p249
        %p633 = pneg %p273
        %p634 = pneg %p270
        %p635 = pneg %p294
        %p636 = pneg %p291
        %p637 = pneg %p315
        %p638 = pneg %p312
        %p639 = pneg %p336
        %p640 = pneg %p333
        %p641 = pneg %p357
        %p642 = pneg %p354
        %p643 = pneg %p378
        %p644 = pneg %p375
        %p645 = pneg %p399
        %p646 = pneg %p396
        %p647 = pneg %p420
        %p648 = pneg %p417
        %p649 = pneg %p441
        %p650 = pneg %p438
        %p651 = pneg %p462
        %p652 = pneg %p459
        %p653 = pneg %p488
        %p654 = pneg %p485
        %s655 = sand.u32 %s475, 1
        %s656 = scalar_lea.sflag [#allocation4], %s655
        %s657 = sand.u32 %s475, 1
        %s658 = smul.addr %s657, 8
        %s659 = scalar_lea.vmem [#allocation5], %s658
        %p660 = scmp.lt.s32.totalorder %s37, 1
        %s661 = scalar_select %p660, %s37, 1
        %s662 = smul.addr %s661, 2
        %s663 = smul.addr %s662, 8
        %s664 = scalar_lea.vmem %s1, %s663
        %v665 = vld [vmem:[%s598] sm:$0xff]
        %v666 = vld [vmem:[%s664] sm:$0xff]
        %v667 = vld [vmem:[%s664 + $0x8] sm:$0xff]
        %v668 = vld [vmem:[%s2] sm:$0xff]
        %v669 = vld [vmem:[%s2 + $0x8] sm:$0xff]
        %v670 = vld [vmem:[%s2 + $0x10] sm:$0xff]
        %v671 = vld [vmem:[%s2 + $0x18] sm:$0xff]
        %vm672 = vcmask 261120
        %v674 = vsel %vm672, %v665, 0
        %676 = vmatprep.subr.mxu0 0.0
        %677 = vmatpush1.msra.mxu0 %v668
        %678 = vmatprep.subr.mxu0 0.0
        %679 = vmatpush1.msra.mxu0 %v669
        %680 = vmatprep.subr.mxu0 0.0
        %681 = vmatpush1.msra.mxu0 %v670
        %682 = vmatprep.subr.mxu0 0.0
        %683 = vmatpush1.msra.mxu0 %v671
        %684 = vmatprep.subr.mxu0 0.0
        %685 = vmatpush1.msra.mxu0 0.0
        %686 = vmatprep.subr.mxu0 0.0
        %687 = vmatpush1.msra.mxu0 0.0
        %688 = vmatprep.subr.mxu0 0.0
        %689 = vmatpush1.msra.mxu0 0.0
        %690 = vmatprep.subr.mxu0 0.0
        %691 = vmatpush1.msra.mxu0 0.0
        %692 = vmatprep.subr.mxu0 0.0
        %693 = vmatpush1.msra.mxu0 0.0
        %694 = vmatprep.subr.mxu0 0.0
        %695 = vmatpush1.msra.mxu0 0.0
        %696 = vmatprep.subr.mxu0 0.0
        %697 = vmatpush1.msra.mxu0 0.0
        %698 = vmatprep.subr.mxu0 0.0
        %699 = vmatpush1.msra.mxu0 0.0
        %700 = vmatprep.subr.mxu0 0.0
        %701 = vmatpush1.msra.mxu0 0.0
        %702 = vmatprep.subr.mxu0 0.0
        %703 = vmatpush1.msra.mxu0 0.0
        %704 = vmatprep.subr.mxu0 0.0
        %705 = vmatpush1.msra.mxu0 0.0
        %706 = vmatprep.subr.mxu0 0.0
        %707 = vmatpush1.msra.mxu0 0.0
        %708 = vmatprep.subr.mxu0 0.0
        %709 = vmatpush1.msra.mxu0 0.0
        %710 = vmatprep.subr.mxu0 0.0
        %711 = vmatpush1.msra.mxu0 0.0
        %712 = vmatprep.subr.mxu0 0.0
        %713 = vmatpush1.msra.mxu0 0.0
        %714 = vmatprep.subr.mxu0 0.0
        %715 = vmatpush1.msra.mxu0 0.0
        %716 = vmatprep.subr.mxu0 0.0
        %717 = vmatpush1.msra.mxu0 0.0
        %718 = vmatprep.subr.mxu0 0.0
        %719 = vmatpush1.msra.mxu0 0.0
        %720 = vmatprep.subr.mxu0 0.0
        %721 = vmatpush1.msra.mxu0 0.0
        %722 = vmatprep.subr.mxu0 0.0
        %723 = vmatpush1.msra.mxu0 0.0
        %724 = vmatprep.subr.mxu0 0.0
        %725 = vmatpush1.msra.mxu0 0.0
        %726 = vmatprep.subr.mxu0 0.0
        %727 = vmatpush1.msra.mxu0 0.0
        %728 = vmatprep.subr.mxu0 0.0
        %729 = vmatpush1.msra.mxu0 0.0
        %730 = vmatprep.subr.mxu0 0.0
        %731 = vmatpush1.msra.mxu0 0.0
        %732 = vmatprep.subr.mxu0 0.0
        %733 = vmatpush1.msra.mxu0 0.0
        %734 = vmatprep.subr.mxu0 0.0
        %735 = vmatpush1.msra.mxu0 0.0
        %736 = vmatprep.subr.mxu0 0.0
        %737 = vmatpush1.msra.mxu0 0.0
        %738 = vmatprep.subr.mxu0 0.0
        %739 = vmatpush1.msra.mxu0 0.0
        %740 = vmatprep.mubr.f32.mxu0 0.0
        %741 = vmatmul.mubr.f32.gmra.mrb[0].mxu0 %v674
        %v742 = vpop.f32.mrb[0].mxu0
        %v743 = vadd.f32 0.0, %v742
        %v744 = vpop.f32.mrb[0].mxu0
        %745 = vdwg.mxu0
        %v746 = vld [vmem:[%s3] sm:$0xff]
        %v747 = vld [vmem:[%s3 + $0x8] sm:$0xff]
        %v748 = vld [vmem:[%s3 + $0x10] sm:$0xff]
        %v749 = vld [vmem:[%s3 + $0x18] sm:$0xff]
        %750 = vmatprep.subr.mxu0 0.0
        %751 = vmatpush1.msra.mxu0 %v746
        %752 = vmatprep.subr.mxu0 0.0
        %753 = vmatpush1.msra.mxu0 %v747
        %754 = vmatprep.subr.mxu0 0.0
        %755 = vmatpush1.msra.mxu0 %v748
        %756 = vmatprep.subr.mxu0 0.0
        %757 = vmatpush1.msra.mxu0 %v749
        %758 = vmatprep.subr.mxu0 0.0
        %759 = vmatpush1.msra.mxu0 0.0
        %760 = vmatprep.subr.mxu0 0.0
        %761 = vmatpush1.msra.mxu0 0.0
        %762 = vmatprep.subr.mxu0 0.0
        %763 = vmatpush1.msra.mxu0 0.0
        %764 = vmatprep.subr.mxu0 0.0
        %765 = vmatpush1.msra.mxu0 0.0
        %766 = vmatprep.subr.mxu0 0.0
        %767 = vmatpush1.msra.mxu0 0.0
        %768 = vmatprep.subr.mxu0 0.0
        %769 = vmatpush1.msra.mxu0 0.0
        %770 = vmatprep.subr.mxu0 0.0
        %771 = vmatpush1.msra.mxu0 0.0
        %772 = vmatprep.subr.mxu0 0.0
        %773 = vmatpush1.msra.mxu0 0.0
        %774 = vmatprep.subr.mxu0 0.0
        %775 = vmatpush1.msra.mxu0 0.0
        %776 = vmatprep.subr.mxu0 0.0
        %777 = vmatpush1.msra.mxu0 0.0
        %778 = vmatprep.subr.mxu0 0.0
        %779 = vmatpush1.msra.mxu0 0.0
        %780 = vmatprep.subr.mxu0 0.0
        %781 = vmatpush1.msra.mxu0 0.0
        %782 = vmatprep.subr.mxu0 0.0
        %783 = vmatpush1.msra.mxu0 0.0
        %784 = vmatprep.subr.mxu0 0.0
        %785 = vmatpush1.msra.mxu0 0.0
        %786 = vmatprep.subr.mxu0 0.0
        %787 = vmatpush1.msra.mxu0 0.0
        %788 = vmatprep.subr.mxu0 0.0
        %789 = vmatpush1.msra.mxu0 0.0
        %790 = vmatprep.subr.mxu0 0.0
        %791 = vmatpush1.msra.mxu0 0.0
        %792 = vmatprep.subr.mxu0 0.0
        %793 = vmatpush1.msra.mxu0 0.0
        %794 = vmatprep.subr.mxu0 0.0
        %795 = vmatpush1.msra.mxu0 0.0
        %796 = vmatprep.subr.mxu0 0.0
        %797 = vmatpush1.msra.mxu0 0.0
        %798 = vmatprep.subr.mxu0 0.0
        %799 = vmatpush1.msra.mxu0 0.0
        %800 = vmatprep.subr.mxu0 0.0
        %801 = vmatpush1.msra.mxu0 0.0
        %802 = vmatprep.subr.mxu0 0.0
        %803 = vmatpush1.msra.mxu0 0.0
        %804 = vmatprep.subr.mxu0 0.0
        %805 = vmatpush1.msra.mxu0 0.0
        %806 = vmatprep.subr.mxu0 0.0
        %807 = vmatpush1.msra.mxu0 0.0
        %808 = vmatprep.subr.mxu0 0.0
        %809 = vmatpush1.msra.mxu0 0.0
        %810 = vmatprep.subr.mxu0 0.0
        %811 = vmatpush1.msra.mxu0 0.0
        %812 = vmatprep.subr.mxu0 0.0
        %813 = vmatpush1.msra.mxu0 0.0
        %814 = vmatprep.mubr.f32.mxu0 0.0
        %815 = vmatmul.mubr.f32.gmra.mrb[0].mxu0 %v674
        %v816 = vpop.f32.mrb[0].mxu0
        %v817 = vadd.f32 0.0, %v816
        %v818 = vpop.f32.mrb[0].mxu0
        %819 = vdwg.mxu0
        %v820 = vld [vmem:[%s4] sm:$0xff]
        %v821 = vld [vmem:[%s4 + $0x8] sm:$0xff]
        %v822 = vld [vmem:[%s4 + $0x10] sm:$0xff]
        %v823 = vld [vmem:[%s4 + $0x18] sm:$0xff]
        %824 = vmatprep.subr.mxu0 0.0
        %825 = vmatpush1.msra.mxu0 %v820
        %826 = vmatprep.subr.mxu0 0.0
        %827 = vmatpush1.msra.mxu0 %v821
        %828 = vmatprep.subr.mxu0 0.0
        %829 = vmatpush1.msra.mxu0 %v822
        %830 = vmatprep.subr.mxu0 0.0
        %831 = vmatpush1.msra.mxu0 %v823
        %832 = vmatprep.subr.mxu0 0.0
        %833 = vmatpush1.msra.mxu0 0.0
        %834 = vmatprep.subr.mxu0 0.0
        %835 = vmatpush1.msra.mxu0 0.0
        %836 = vmatprep.subr.mxu0 0.0
        %837 = vmatpush1.msra.mxu0 0.0
        %838 = vmatprep.subr.mxu0 0.0
        %839 = vmatpush1.msra.mxu0 0.0
        %840 = vmatprep.subr.mxu0 0.0
        %841 = vmatpush1.msra.mxu0 0.0
        %842 = vmatprep.subr.mxu0 0.0
        %843 = vmatpush1.msra.mxu0 0.0
        %844 = vmatprep.subr.mxu0 0.0
        %845 = vmatpush1.msra.mxu0 0.0
        %846 = vmatprep.subr.mxu0 0.0
        %847 = vmatpush1.msra.mxu0 0.0
        %848 = vmatprep.subr.mxu0 0.0
        %849 = vmatpush1.msra.mxu0 0.0
        %850 = vmatprep.subr.mxu0 0.0
        %851 = vmatpush1.msra.mxu0 0.0
        %852 = vmatprep.subr.mxu0 0.0
        %853 = vmatpush1.msra.mxu0 0.0
        %854 = vmatprep.subr.mxu0 0.0
        %855 = vmatpush1.msra.mxu0 0.0
        %856 = vmatprep.subr.mxu0 0.0
        %857 = vmatpush1.msra.mxu0 0.0
        %858 = vmatprep.subr.mxu0 0.0
        %859 = vmatpush1.msra.mxu0 0.0
        %860 = vmatprep.subr.mxu0 0.0
        %861 = vmatpush1.msra.mxu0 0.0
        %862 = vmatprep.subr.mxu0 0.0
        %863 = vmatpush1.msra.mxu0 0.0
        %864 = vmatprep.subr.mxu0 0.0
        %865 = vmatpush1.msra.mxu0 0.0
        %866 = vmatprep.subr.mxu0 0.0
        %867 = vmatpush1.msra.mxu0 0.0
        %868 = vmatprep.subr.mxu0 0.0
        %869 = vmatpush1.msra.mxu0 0.0
        %870 = vmatprep.subr.mxu0 0.0
        %871 = vmatpush1.msra.mxu0 0.0
        %872 = vmatprep.subr.mxu0 0.0
        %873 = vmatpush1.msra.mxu0 0.0
        %874 = vmatprep.subr.mxu0 0.0
        %875 = vmatpush1.msra.mxu0 0.0
        %876 = vmatprep.subr.mxu0 0.0
        %877 = vmatpush1.msra.mxu0 0.0
        %878 = vmatprep.subr.mxu0 0.0
        %879 = vmatpush1.msra.mxu0 0.0
        %880 = vmatprep.subr.mxu0 0.0
        %881 = vmatpush1.msra.mxu0 0.0
        %882 = vmatprep.subr.mxu0 0.0
        %883 = vmatpush1.msra.mxu0 0.0
        %884 = vmatprep.subr.mxu0 0.0
        %885 = vmatpush1.msra.mxu0 0.0
        %886 = vmatprep.subr.mxu0 0.0
        %887 = vmatpush1.msra.mxu0 0.0
        %888 = vmatprep.mubr.f32.mxu0 0.0
        %889 = vmatmul.mubr.f32.gmra.mrb[0].mxu0 %v674
        %v890 = vpop.f32.mrb[0].mxu0
        %v891 = vadd.f32 0.0, %v890
        %v892 = vpop.f32.mrb[0].mxu0
        %893 = vdwg.mxu0
        %vm894 = vcmask 130048
        %v896 = vsel %vm894, %v743, 0
        %v899 = vsel %vm894, %v817, 0
        %901 = vmatprep.subr.mxu0 0.0
        %902 = vmatpush1.xpose.msra.mxu0 %v899
        %903 = vmatprep.subr.mxu0 0.0
        %904 = vmatpush1.xpose.msra.mxu0 0.0
        %905 = vmatprep.subr.mxu0 0.0
        %906 = vmatpush1.xpose.msra.mxu0 0.0
        %907 = vmatprep.subr.mxu0 0.0
        %908 = vmatpush1.xpose.msra.mxu0 0.0
        %909 = vmatprep.subr.mxu0 0.0
        %910 = vmatpush1.xpose.msra.mxu0 0.0
        %911 = vmatprep.subr.mxu0 0.0
        %912 = vmatpush1.xpose.msra.mxu0 0.0
        %913 = vmatprep.subr.mxu0 0.0
        %914 = vmatpush1.xpose.msra.mxu0 0.0
        %915 = vmatprep.subr.mxu0 0.0
        %916 = vmatpush1.xpose.msra.mxu0 0.0
        %917 = vmatprep.subr.mxu0 0.0
        %918 = vmatpush1.xpose.msra.mxu0 0.0
        %919 = vmatprep.subr.mxu0 0.0
        %920 = vmatpush1.xpose.msra.mxu0 0.0
        %921 = vmatprep.subr.mxu0 0.0
        %922 = vmatpush1.xpose.msra.mxu0 0.0
        %923 = vmatprep.subr.mxu0 0.0
        %924 = vmatpush1.xpose.msra.mxu0 0.0
        %925 = vmatprep.subr.mxu0 0.0
        %926 = vmatpush1.xpose.msra.mxu0 0.0
        %927 = vmatprep.subr.mxu0 0.0
        %928 = vmatpush1.xpose.msra.mxu0 0.0
        %929 = vmatprep.subr.mxu0 0.0
        %930 = vmatpush1.xpose.msra.mxu0 0.0
        %931 = vmatprep.subr.mxu0 0.0
        %932 = vmatpush1.xpose.msra.mxu0 0.0
        %933 = vmatprep.subr.mxu0 0.0
        %934 = vmatpush1.xpose.msra.mxu0 0.0
        %935 = vmatprep.subr.mxu0 0.0
        %936 = vmatpush1.xpose.msra.mxu0 0.0
        %937 = vmatprep.subr.mxu0 0.0
        %938 = vmatpush1.xpose.msra.mxu0 0.0
        %939 = vmatprep.subr.mxu0 0.0
        %940 = vmatpush1.xpose.msra.mxu0 0.0
        %941 = vmatprep.subr.mxu0 0.0
        %942 = vmatpush1.xpose.msra.mxu0 0.0
        %943 = vmatprep.subr.mxu0 0.0
        %944 = vmatpush1.xpose.msra.mxu0 0.0
        %945 = vmatprep.subr.mxu0 0.0
        %946 = vmatpush1.xpose.msra.mxu0 0.0
        %947 = vmatprep.subr.mxu0 0.0
        %948 = vmatpush1.xpose.msra.mxu0 0.0
        %949 = vmatprep.subr.mxu0 0.0
        %950 = vmatpush1.xpose.msra.mxu0 0.0
        %951 = vmatprep.subr.mxu0 0.0
        %952 = vmatpush1.xpose.msra.mxu0 0.0
        %953 = vmatprep.subr.mxu0 0.0
        %954 = vmatpush1.xpose.msra.mxu0 0.0
        %955 = vmatprep.subr.mxu0 0.0
        %956 = vmatpush1.xpose.msra.mxu0 0.0
        %957 = vmatprep.subr.mxu0 0.0
        %958 = vmatpush1.xpose.msra.mxu0 0.0
        %959 = vmatprep.subr.mxu0 0.0
        %960 = vmatpush1.xpose.msra.mxu0 0.0
        %961 = vmatprep.subr.mxu0 0.0
        %962 = vmatpush1.xpose.msra.mxu0 0.0
        %963 = vmatprep.subr.mxu0 0.0
        %964 = vmatpush1.xpose.msra.mxu0 0.0
        %965 = vmatprep.mubr.f32.mxu0 0.0
        %966 = vmatmul.mubr.f32.gmra.mrb[0].mxu0 %v896
        %v967 = vpop.f32.mrb[0].mxu0
        %v968 = vadd.f32 0.0, %v967
        %v969 = vpop.f32.mrb[0].mxu0
        %970 = vdwg.mxu0
        %v971 = vmul.f32 %v968, 0.25
        %vm972 = vcmask 64512
        %v973 = vsel %vm972, %v971, -inf
        %974 = vmax.xlane.f32.xlu0 %v973
        %v975 = vpop.xlane.xlu0 %974
        %v976 = vsub.f32 %v971, %v975
        %v977 = vmul.f32 %v976, 1.442695
        %v978 = vpow.pop %v977
        %v979 = vsel %vm972, %v978, 0.0
        %980 = vadd.xlane.f32.xlu0 %v979
        %v981 = vpop.xlane.xlu0 %980
        %v982 = vrcp.pop %v981
        %v983 = vmul.f32 %v978, %v982
        %v985 = vsel %vm972, %v983, 0
        %987 = vmatprep.subr.mxu0 0.0
        %988 = vmatpush1.msra.mxu0 %v891
        %989 = vmatprep.subr.mxu0 0.0
        %990 = vmatpush1.msra.mxu0 0.0
        %991 = vmatprep.subr.mxu0 0.0
        %992 = vmatpush1.msra.mxu0 0.0
        %993 = vmatprep.subr.mxu0 0.0
        %994 = vmatpush1.msra.mxu0 0.0
        %995 = vmatprep.subr.mxu0 0.0
        %996 = vmatpush1.msra.mxu0 0.0
        %997 = vmatprep.subr.mxu0 0.0
        %998 = vmatpush1.msra.mxu0 0.0
        %999 = vmatprep.subr.mxu0 0.0
        %1000 = vmatpush1.msra.mxu0 0.0
        %1001 = vmatprep.subr.mxu0 0.0
        %1002 = vmatpush1.msra.mxu0 0.0
        %1003 = vmatprep.subr.mxu0 0.0
        %1004 = vmatpush1.msra.mxu0 0.0
        %1005 = vmatprep.subr.mxu0 0.0
        %1006 = vmatpush1.msra.mxu0 0.0
        %1007 = vmatprep.subr.mxu0 0.0
        %1008 = vmatpush1.msra.mxu0 0.0
        %1009 = vmatprep.subr.mxu0 0.0
        %1010 = vmatpush1.msra.mxu0 0.0
        %1011 = vmatprep.subr.mxu0 0.0
        %1012 = vmatpush1.msra.mxu0 0.0
        %1013 = vmatprep.subr.mxu0 0.0
        %1014 = vmatpush1.msra.mxu0 0.0
        %1015 = vmatprep.subr.mxu0 0.0
        %1016 = vmatpush1.msra.mxu0 0.0
        %1017 = vmatprep.subr.mxu0 0.0
        %1018 = vmatpush1.msra.mxu0 0.0
        %1019 = vmatprep.subr.mxu0 0.0
        %1020 = vmatpush1.msra.mxu0 0.0
        %1021 = vmatprep.subr.mxu0 0.0
        %1022 = vmatpush1.msra.mxu0 0.0
        %1023 = vmatprep.subr.mxu0 0.0
        %1024 = vmatpush1.msra.mxu0 0.0
        %1025 = vmatprep.subr.mxu0 0.0
        %1026 = vmatpush1.msra.mxu0 0.0
        %1027 = vmatprep.subr.mxu0 0.0
        %1028 = vmatpush1.msra.mxu0 0.0
        %1029 = vmatprep.subr.mxu0 0.0
        %1030 = vmatpush1.msra.mxu0 0.0
        %1031 = vmatprep.subr.mxu0 0.0
        %1032 = vmatpush1.msra.mxu0 0.0
        %1033 = vmatprep.subr.mxu0 0.0
        %1034 = vmatpush1.msra.mxu0 0.0
        %1035 = vmatprep.subr.mxu0 0.0
        %1036 = vmatpush1.msra.mxu0 0.0
        %1037 = vmatprep.subr.mxu0 0.0
        %1038 = vmatpush1.msra.mxu0 0.0
        %1039 = vmatprep.subr.mxu0 0.0
        %1040 = vmatpush1.msra.mxu0 0.0
        %1041 = vmatprep.subr.mxu0 0.0
        %1042 = vmatpush1.msra.mxu0 0.0
        %1043 = vmatprep.subr.mxu0 0.0
        %1044 = vmatpush1.msra.mxu0 0.0
        %1045 = vmatprep.subr.mxu0 0.0
        %1046 = vmatpush1.msra.mxu0 0.0
        %1047 = vmatprep.subr.mxu0 0.0
        %1048 = vmatpush1.msra.mxu0 0.0
        %1049 = vmatprep.subr.mxu0 0.0
        %1050 = vmatpush1.msra.mxu0 0.0
        %1051 = vmatprep.mubr.f32.mxu0 0.0
        %1052 = vmatmul.mubr.f32.gmra.mrb[0].mxu0 %v985
        %v1053 = vpop.f32.mrb[0].mxu0
        %v1054 = vadd.f32 0.0, %v1053
        %v1055 = vpop.f32.mrb[0].mxu0
        %1056 = vdwg.mxu0
        %v1057 = vld [vmem:[%s5] sm:$0xff]
        %v1058 = vld [vmem:[%s5 + $0x8] sm:$0xff]
        %v1059 = vld [vmem:[%s5 + $0x10] sm:$0xff]
        %v1060 = vld [vmem:[%s5 + $0x18] sm:$0xff]
        %v1062 = vsel %vm672, %v1054, 0
        %1064 = vmatprep.subr.mxu0 0.0
        %1065 = vmatpush1.msra.mxu0 %v1057
        %1066 = vmatprep.subr.mxu0 0.0
        %1067 = vmatpush1.msra.mxu0 %v1058
        %1068 = vmatprep.subr.mxu0 0.0
        %1069 = vmatpush1.msra.mxu0 %v1059
        %1070 = vmatprep.subr.mxu0 0.0
        %1071 = vmatpush1.msra.mxu0 %v1060
        %1072 = vmatprep.subr.mxu0 0.0
        %1073 = vmatpush1.msra.mxu0 0.0
        %1074 = vmatprep.subr.mxu0 0.0
        %1075 = vmatpush1.msra.mxu0 0.0
        %1076 = vmatprep.subr.mxu0 0.0
        %1077 = vmatpush1.msra.mxu0 0.0
        %1078 = vmatprep.subr.mxu0 0.0
        %1079 = vmatpush1.msra.mxu0 0.0
        %1080 = vmatprep.subr.mxu0 0.0
        %1081 = vmatpush1.msra.mxu0 0.0
        %1082 = vmatprep.subr.mxu0 0.0
        %1083 = vmatpush1.msra.mxu0 0.0
        %1084 = vmatprep.subr.mxu0 0.0
        %1085 = vmatpush1.msra.mxu0 0.0
        %1086 = vmatprep.subr.mxu0 0.0
        %1087 = vmatpush1.msra.mxu0 0.0
        %1088 = vmatprep.subr.mxu0 0.0
        %1089 = vmatpush1.msra.mxu0 0.0
        %1090 = vmatprep.subr.mxu0 0.0
        %1091 = vmatpush1.msra.mxu0 0.0
        %1092 = vmatprep.subr.mxu0 0.0
        %1093 = vmatpush1.msra.mxu0 0.0
        %1094 = vmatprep.subr.mxu0 0.0
        %1095 = vmatpush1.msra.mxu0 0.0
        %1096 = vmatprep.subr.mxu0 0.0
        %1097 = vmatpush1.msra.mxu0 0.0
        %1098 = vmatprep.subr.mxu0 0.0
        %1099 = vmatpush1.msra.mxu0 0.0
        %1100 = vmatprep.subr.mxu0 0.0
        %1101 = vmatpush1.msra.mxu0 0.0
        %1102 = vmatprep.subr.mxu0 0.0
        %1103 = vmatpush1.msra.mxu0 0.0
        %1104 = vmatprep.subr.mxu0 0.0
        %1105 = vmatpush1.msra.mxu0 0.0
        %1106 = vmatprep.subr.mxu0 0.0
        %1107 = vmatpush1.msra.mxu0 0.0
        %1108 = vmatprep.subr.mxu0 0.0
        %1109 = vmatpush1.msra.mxu0 0.0
        %1110 = vmatprep.subr.mxu0 0.0
        %1111 = vmatpush1.msra.mxu0 0.0
        %1112 = vmatprep.subr.mxu0 0.0
        %1113 = vmatpush1.msra.mxu0 0.0
        %1114 = vmatprep.subr.mxu0 0.0
        %1115 = vmatpush1.msra.mxu0 0.0
        %1116 = vmatprep.subr.mxu0 0.0
        %1117 = vmatpush1.msra.mxu0 0.0
        %1118 = vmatprep.subr.mxu0 0.0
        %1119 = vmatpush1.msra.mxu0 0.0
        %1120 = vmatprep.subr.mxu0 0.0
        %1121 = vmatpush1.msra.mxu0 0.0
        %1122 = vmatprep.subr.mxu0 0.0
        %1123 = vmatpush1.msra.mxu0 0.0
        %1124 = vmatprep.subr.mxu0 0.0
        %1125 = vmatpush1.msra.mxu0 0.0
        %1126 = vmatprep.subr.mxu0 0.0
        %1127 = vmatpush1.msra.mxu0 0.0
        %1128 = vmatprep.mubr.f32.mxu0 0.0
        %1129 = vmatmul.mubr.f32.gmra.mrb[0].mxu0 %v1062
        %v1130 = vpop.f32.mrb[0].mxu0
        %v1131 = vadd.f32 %v665, %v1130
        %v1132 = vpop.f32.mrb[0].mxu0
        %1133 = vdwg.mxu0
        %v1134 = vsel %vm672, %v1131, 0.0
        %1135 = vadd.xlane.f32.xlu0 %v1134
        %v1136 = vpop.xlane.xlu0 %1135
        %v1137 = vrcp.pop 32.0
        %v1138 = vmul.f32 %v1136, %v1137
        %v1139 = vsub.f32 %v1131, %v1138
        %v1140 = vmul.f32 %v1139, %v1139
        %v1141 = vsel %vm672, %v1140, 0.0
        %1142 = vadd.xlane.f32.xlu0 %v1141
        %v1143 = vpop.xlane.xlu0 %1142
        %v1144 = vmul.f32 %v1143, %v1137
        %v1145 = vadd.f32 %v1144, 1e-05
        %v1146 = vrsqrt.pop %v1145
        %v1147 = vmul.f32 %v1139, %v1146
        %v1148 = vld [vmem:[%s14] sm:$0x1]
        %v1150 = vlaneseq
        %v1151 = vshrl.u32 %v1150, 7
        %v1152 = vsub.s32 0, %v1151
        %v1153 = vrot.slane %v1148, %v1152
        %v1155 = vmul.f32 %v1147, %v1153
        %v1156 = vld [vmem:[%s15] sm:$0x1]
        %v1158 = vlaneseq
        %v1159 = vshrl.u32 %v1158, 7
        %v1160 = vsub.s32 0, %v1159
        %v1161 = vrot.slane %v1156, %v1160
        %v1163 = vadd.f32 %v1155, %v1161
        %v1164 = vld [vmem:[%s6] sm:$0xff]
        %v1165 = vld [vmem:[%s6 + $0x8] sm:$0xff]
        %v1166 = vld [vmem:[%s6 + $0x10] sm:$0xff]
        %v1167 = vld [vmem:[%s6 + $0x18] sm:$0xff]
        %v1169 = vsel %vm672, %v1163, 0
        %1171 = vmatprep.subr.mxu0 0.0
        %1172 = vmatpush1.msra.mxu0 %v1164
        %1173 = vmatprep.subr.mxu0 0.0
        %1174 = vmatpush1.msra.mxu0 %v1165
        %1175 = vmatprep.subr.mxu0 0.0
        %1176 = vmatpush1.msra.mxu0 %v1166
        %1177 = vmatprep.subr.mxu0 0.0
        %1178 = vmatpush1.msra.mxu0 %v1167
        %1179 = vmatprep.subr.mxu0 0.0
        %1180 = vmatpush1.msra.mxu0 0.0
        %1181 = vmatprep.subr.mxu0 0.0
        %1182 = vmatpush1.msra.mxu0 0.0
        %1183 = vmatprep.subr.mxu0 0.0
        %1184 = vmatpush1.msra.mxu0 0.0
        %1185 = vmatprep.subr.mxu0 0.0
        %1186 = vmatpush1.msra.mxu0 0.0
        %1187 = vmatprep.subr.mxu0 0.0
        %1188 = vmatpush1.msra.mxu0 0.0
        %1189 = vmatprep.subr.mxu0 0.0
        %1190 = vmatpush1.msra.mxu0 0.0
        %1191 = vmatprep.subr.mxu0 0.0
        %1192 = vmatpush1.msra.mxu0 0.0
        %1193 = vmatprep.subr.mxu0 0.0
        %1194 = vmatpush1.msra.mxu0 0.0
        %1195 = vmatprep.subr.mxu0 0.0
        %1196 = vmatpush1.msra.mxu0 0.0
        %1197 = vmatprep.subr.mxu0 0.0
        %1198 = vmatpush1.msra.mxu0 0.0
        %1199 = vmatprep.subr.mxu0 0.0
        %1200 = vmatpush1.msra.mxu0 0.0
        %1201 = vmatprep.subr.mxu0 0.0
        %1202 = vmatpush1.msra.mxu0 0.0
        %1203 = vmatprep.subr.mxu0 0.0
        %1204 = vmatpush1.msra.mxu0 0.0
        %1205 = vmatprep.subr.mxu0 0.0
        %1206 = vmatpush1.msra.mxu0 0.0
        %1207 = vmatprep.subr.mxu0 0.0
        %1208 = vmatpush1.msra.mxu0 0.0
        %1209 = vmatprep.subr.mxu0 0.0
        %1210 = vmatpush1.msra.mxu0 0.0
        %1211 = vmatprep.subr.mxu0 0.0
        %1212 = vmatpush1.msra.mxu0 0.0
        %1213 = vmatprep.subr.mxu0 0.0
        %1214 = vmatpush1.msra.mxu0 0.0
        %1215 = vmatprep.subr.mxu0 0.0
        %1216 = vmatpush1.msra.mxu0 0.0
        %1217 = vmatprep.subr.mxu0 0.0
        %1218 = vmatpush1.msra.mxu0 0.0
        %1219 = vmatprep.subr.mxu0 0.0
        %1220 = vmatpush1.msra.mxu0 0.0
        %1221 = vmatprep.subr.mxu0 0.0
        %1222 = vmatpush1.msra.mxu0 0.0
        %1223 = vmatprep.subr.mxu0 0.0
        %1224 = vmatpush1.msra.mxu0 0.0
        %1225 = vmatprep.subr.mxu0 0.0
        %1226 = vmatpush1.msra.mxu0 0.0
        %1227 = vmatprep.subr.mxu0 0.0
        %1228 = vmatpush1.msra.mxu0 0.0
        %1229 = vmatprep.subr.mxu0 0.0
        %1230 = vmatpush1.msra.mxu0 0.0
        %1231 = vmatprep.subr.mxu0 0.0
        %1232 = vmatpush1.msra.mxu0 0.0
        %1233 = vmatprep.subr.mxu0 0.0
        %1234 = vmatpush1.msra.mxu0 0.0
        %1235 = vmatprep.mubr.f32.mxu0 0.0
        %1236 = vmatmul.mubr.f32.gmra.mrb[0].mxu0 %v1169
        %v1237 = vpop.f32.mrb[0].mxu0
        %v1238 = vadd.f32 0.0, %v1237
        %v1239 = vpop.f32.mrb[0].mxu0
        %1240 = vdwg.mxu0
        %v1241 = vld [vmem:[%s7] sm:$0xff]
        %v1242 = vld [vmem:[%s7 + $0x8] sm:$0xff]
        %v1243 = vld [vmem:[%s7 + $0x10] sm:$0xff]
        %v1244 = vld [vmem:[%s7 + $0x18] sm:$0xff]
        %v1246 = vsel %vm672, %v666, 0
        %v1249 = vsel %vm672, %v667, 0
        %1251 = vmatprep.subr.mxu0 0.0
        %1252 = vmatpush1.msra.mxu0 %v1241
        %1253 = vmatprep.subr.mxu0 0.0
        %1254 = vmatpush1.msra.mxu0 %v1242
        %1255 = vmatprep.subr.mxu0 0.0
        %1256 = vmatpush1.msra.mxu0 %v1243
        %1257 = vmatprep.subr.mxu0 0.0
        %1258 = vmatpush1.msra.mxu0 %v1244
        %1259 = vmatprep.subr.mxu0 0.0
        %1260 = vmatpush1.msra.mxu0 0.0
        %1261 = vmatprep.subr.mxu0 0.0
        %1262 = vmatpush1.msra.mxu0 0.0
        %1263 = vmatprep.subr.mxu0 0.0
        %1264 = vmatpush1.msra.mxu0 0.0
        %1265 = vmatprep.subr.mxu0 0.0
        %1266 = vmatpush1.msra.mxu0 0.0
        %1267 = vmatprep.subr.mxu0 0.0
        %1268 = vmatpush1.msra.mxu0 0.0
        %1269 = vmatprep.subr.mxu0 0.0
        %1270 = vmatpush1.msra.mxu0 0.0
        %1271 = vmatprep.subr.mxu0 0.0
        %1272 = vmatpush1.msra.mxu0 0.0
        %1273 = vmatprep.subr.mxu0 0.0
        %1274 = vmatpush1.msra.mxu0 0.0
        %1275 = vmatprep.subr.mxu0 0.0
        %1276 = vmatpush1.msra.mxu0 0.0
        %1277 = vmatprep.subr.mxu0 0.0
        %1278 = vmatpush1.msra.mxu0 0.0
        %1279 = vmatprep.subr.mxu0 0.0
        %1280 = vmatpush1.msra.mxu0 0.0
        %1281 = vmatprep.subr.mxu0 0.0
        %1282 = vmatpush1.msra.mxu0 0.0
        %1283 = vmatprep.subr.mxu0 0.0
        %1284 = vmatpush1.msra.mxu0 0.0
        %1285 = vmatprep.subr.mxu0 0.0
        %1286 = vmatpush1.msra.mxu0 0.0
        %1287 = vmatprep.subr.mxu0 0.0
        %1288 = vmatpush1.msra.mxu0 0.0
        %1289 = vmatprep.subr.mxu0 0.0
        %1290 = vmatpush1.msra.mxu0 0.0
        %1291 = vmatprep.subr.mxu0 0.0
        %1292 = vmatpush1.msra.mxu0 0.0
        %1293 = vmatprep.subr.mxu0 0.0
        %1294 = vmatpush1.msra.mxu0 0.0
        %1295 = vmatprep.subr.mxu0 0.0
        %1296 = vmatpush1.msra.mxu0 0.0
        %1297 = vmatprep.subr.mxu0 0.0
        %1298 = vmatpush1.msra.mxu0 0.0
        %1299 = vmatprep.subr.mxu0 0.0
        %1300 = vmatpush1.msra.mxu0 0.0
        %1301 = vmatprep.subr.mxu0 0.0
        %1302 = vmatpush1.msra.mxu0 0.0
        %1303 = vmatprep.subr.mxu0 0.0
        %1304 = vmatpush1.msra.mxu0 0.0
        %1305 = vmatprep.subr.mxu0 0.0
        %1306 = vmatpush1.msra.mxu0 0.0
        %1307 = vmatprep.subr.mxu0 0.0
        %1308 = vmatpush1.msra.mxu0 0.0
        %1309 = vmatprep.subr.mxu0 0.0
        %1310 = vmatpush1.msra.mxu0 0.0
        %1311 = vmatprep.subr.mxu0 0.0
        %1312 = vmatpush1.msra.mxu0 0.0
        %1313 = vmatprep.subr.mxu0 0.0
        %1314 = vmatpush1.msra.mxu0 0.0
        %1315 = vmatprep.mubr.f32.mxu0 0.0
        %1316 = vmatmul.mubr.f32.gmra.mrb[0].mxu0 %v1246
        %v1317 = vpop.f32.mrb[0].mxu0
        %v1318 = vadd.f32 0.0, %v1317
        %v1319 = vpop.f32.mrb[0].mxu0
        %1320 = vmatprep.mubr.f32.mxu0 0.0
        %1321 = vmatmul.mubr.f32.gmra.mrb[0].mxu0 %v1249
        %v1322 = vpop.f32.mrb[0].mxu0
        %v1323 = vadd.f32 0.0, %v1322
        %v1324 = vpop.f32.mrb[0].mxu0
        %1325 = vdwg.mxu0
        %v1326 = vld [vmem:[%s8] sm:$0xff]
        %v1327 = vld [vmem:[%s8 + $0x8] sm:$0xff]
        %v1328 = vld [vmem:[%s8 + $0x10] sm:$0xff]
        %v1329 = vld [vmem:[%s8 + $0x18] sm:$0xff]
        %1330 = vmatprep.subr.mxu0 0.0
        %1331 = vmatpush1.msra.mxu0 %v1326
        %1332 = vmatprep.subr.mxu0 0.0
        %1333 = vmatpush1.msra.mxu0 %v1327
        %1334 = vmatprep.subr.mxu0 0.0
        %1335 = vmatpush1.msra.mxu0 %v1328
        %1336 = vmatprep.subr.mxu0 0.0
        %1337 = vmatpush1.msra.mxu0 %v1329
        %1338 = vmatprep.subr.mxu0 0.0
        %1339 = vmatpush1.msra.mxu0 0.0
        %1340 = vmatprep.subr.mxu0 0.0
        %1341 = vmatpush1.msra.mxu0 0.0
        %1342 = vmatprep.subr.mxu0 0.0
        %1343 = vmatpush1.msra.mxu0 0.0
        %1344 = vmatprep.subr.mxu0 0.0
        %1345 = vmatpush1.msra.mxu0 0.0
        %1346 = vmatprep.subr.mxu0 0.0
        %1347 = vmatpush1.msra.mxu0 0.0
        %1348 = vmatprep.subr.mxu0 0.0
        %1349 = vmatpush1.msra.mxu0 0.0
        %1350 = vmatprep.subr.mxu0 0.0
        %1351 = vmatpush1.msra.mxu0 0.0
        %1352 = vmatprep.subr.mxu0 0.0
        %1353 = vmatpush1.msra.mxu0 0.0
        %1354 = vmatprep.subr.mxu0 0.0
        %1355 = vmatpush1.msra.mxu0 0.0
        %1356 = vmatprep.subr.mxu0 0.0
        %1357 = vmatpush1.msra.mxu0 0.0
        %1358 = vmatprep.subr.mxu0 0.0
        %1359 = vmatpush1.msra.mxu0 0.0
        %1360 = vmatprep.subr.mxu0 0.0
        %1361 = vmatpush1.msra.mxu0 0.0
        %1362 = vmatprep.subr.mxu0 0.0
        %1363 = vmatpush1.msra.mxu0 0.0
        %1364 = vmatprep.subr.mxu0 0.0
        %1365 = vmatpush1.msra.mxu0 0.0
        %1366 = vmatprep.subr.mxu0 0.0
        %1367 = vmatpush1.msra.mxu0 0.0
        %1368 = vmatprep.subr.mxu0 0.0
        %1369 = vmatpush1.msra.mxu0 0.0
        %1370 = vmatprep.subr.mxu0 0.0
        %1371 = vmatpush1.msra.mxu0 0.0
        %1372 = vmatprep.subr.mxu0 0.0
        %1373 = vmatpush1.msra.mxu0 0.0
        %1374 = vmatprep.subr.mxu0 0.0
        %1375 = vmatpush1.msra.mxu0 0.0
        %1376 = vmatprep.subr.mxu0 0.0
        %1377 = vmatpush1.msra.mxu0 0.0
        %1378 = vmatprep.subr.mxu0 0.0
        %1379 = vmatpush1.msra.mxu0 0.0
        %1380 = vmatprep.subr.mxu0 0.0
        %1381 = vmatpush1.msra.mxu0 0.0
        %1382 = vmatprep.subr.mxu0 0.0
        %1383 = vmatpush1.msra.mxu0 0.0
        %1384 = vmatprep.subr.mxu0 0.0
        %1385 = vmatpush1.msra.mxu0 0.0
        %1386 = vmatprep.subr.mxu0 0.0
        %1387 = vmatpush1.msra.mxu0 0.0
        %1388 = vmatprep.subr.mxu0 0.0
        %1389 = vmatpush1.msra.mxu0 0.0
        %1390 = vmatprep.subr.mxu0 0.0
        %1391 = vmatpush1.msra.mxu0 0.0
        %1392 = vmatprep.subr.mxu0 0.0
        %1393 = vmatpush1.msra.mxu0 0.0
        %1394 = vmatprep.mubr.f32.mxu0 0.0
        %1395 = vmatmul.mubr.f32.gmra.mrb[0].mxu0 %v1246
        %v1396 = vpop.f32.mrb[0].mxu0
        %v1397 = vadd.f32 0.0, %v1396
        %v1398 = vpop.f32.mrb[0].mxu0
        %1399 = vmatprep.mubr.f32.mxu0 0.0
        %1400 = vmatmul.mubr.f32.gmra.mrb[0].mxu0 %v1249
        %v1401 = vpop.f32.mrb[0].mxu0
        %v1402 = vadd.f32 0.0, %v1401
        %v1403 = vpop.f32.mrb[0].mxu0
        %1404 = vdwg.mxu0
        %v1406 = vsel %vm894, %v1238, 0
        %v1409 = vsel %vm894, %v1318, 0
        %v1412 = vsel %vm894, %v1323, 0
        %1414 = vmatprep.subr.mxu0 0.0
        %1415 = vmatpush1.xpose.msra.mxu0 %v1409
        %1416 = vmatprep.subr.mxu0 0.0
        %1417 = vmatpush1.xpose.msra.mxu0 %v1412
        %1418 = vmatprep.subr.mxu0 0.0
        %1419 = vmatpush1.xpose.msra.mxu0 0.0
        %1420 = vmatprep.subr.mxu0 0.0
        %1421 = vmatpush1.xpose.msra.mxu0 0.0
        %1422 = vmatprep.subr.mxu0 0.0
        %1423 = vmatpush1.xpose.msra.mxu0 0.0
        %1424 = vmatprep.subr.mxu0 0.0
        %1425 = vmatpush1.xpose.msra.mxu0 0.0
        %1426 = vmatprep.subr.mxu0 0.0
        %1427 = vmatpush1.xpose.msra.mxu0 0.0
        %1428 = vmatprep.subr.mxu0 0.0
        %1429 = vmatpush1.xpose.msra.mxu0 0.0
        %1430 = vmatprep.subr.mxu0 0.0
        %1431 = vmatpush1.xpose.msra.mxu0 0.0
        %1432 = vmatprep.subr.mxu0 0.0
        %1433 = vmatpush1.xpose.msra.mxu0 0.0
        %1434 = vmatprep.subr.mxu0 0.0
        %1435 = vmatpush1.xpose.msra.mxu0 0.0
        %1436 = vmatprep.subr.mxu0 0.0
        %1437 = vmatpush1.xpose.msra.mxu0 0.0
        %1438 = vmatprep.subr.mxu0 0.0
        %1439 = vmatpush1.xpose.msra.mxu0 0.0
        %1440 = vmatprep.subr.mxu0 0.0
        %1441 = vmatpush1.xpose.msra.mxu0 0.0
        %1442 = vmatprep.subr.mxu0 0.0
        %1443 = vmatpush1.xpose.msra.mxu0 0.0
        %1444 = vmatprep.subr.mxu0 0.0
        %1445 = vmatpush1.xpose.msra.mxu0 0.0
        %1446 = vmatprep.subr.mxu0 0.0
        %1447 = vmatpush1.xpose.msra.mxu0 0.0
        %1448 = vmatprep.subr.mxu0 0.0
        %1449 = vmatpush1.xpose.msra.mxu0 0.0
        %1450 = vmatprep.subr.mxu0 0.0
        %1451 = vmatpush1.xpose.msra.mxu0 0.0
        %1452 = vmatprep.subr.mxu0 0.0
        %1453 = vmatpush1.xpose.msra.mxu0 0.0
        %1454 = vmatprep.subr.mxu0 0.0
        %1455 = vmatpush1.xpose.msra.mxu0 0.0
        %1456 = vmatprep.subr.mxu0 0.0
        %1457 = vmatpush1.xpose.msra.mxu0 0.0
        %1458 = vmatprep.subr.mxu0 0.0
        %1459 = vmatpush1.xpose.msra.mxu0 0.0
        %1460 = vmatprep.subr.mxu0 0.0
        %1461 = vmatpush1.xpose.msra.mxu0 0.0
        %1462 = vmatprep.subr.mxu0 0.0
        %1463 = vmatpush1.xpose.msra.mxu0 0.0
        %1464 = vmatprep.subr.mxu0 0.0
        %1465 = vmatpush1.xpose.msra.mxu0 0.0
        %1466 = vmatprep.subr.mxu0 0.0
        %1467 = vmatpush1.xpose.msra.mxu0 0.0
        %1468 = vmatprep.subr.mxu0 0.0
        %1469 = vmatpush1.xpose.msra.mxu0 0.0
        %1470 = vmatprep.subr.mxu0 0.0
        %1471 = vmatpush1.xpose.msra.mxu0 0.0
        %1472 = vmatprep.subr.mxu0 0.0
        %1473 = vmatpush1.xpose.msra.mxu0 0.0
        %1474 = vmatprep.subr.mxu0 0.0
        %1475 = vmatpush1.xpose.msra.mxu0 0.0
        %1476 = vmatprep.subr.mxu0 0.0
        %1477 = vmatpush1.xpose.msra.mxu0 0.0
        %1478 = vmatprep.mubr.f32.mxu0 0.0
        %1479 = vmatmul.mubr.f32.gmra.mrb[0].mxu0 %v1406
        %v1480 = vpop.f32.mrb[0].mxu0
        %v1481 = vadd.f32 0.0, %v1480
        %v1482 = vpop.f32.mrb[0].mxu0
        %1483 = vdwg.mxu0
        %v1484 = vmul.f32 %v1481, 0.25
        %v1485 = vsel %vm894, %v1484, -inf
        %1486 = vmax.xlane.f32.xlu0 %v1485
        %v1487 = vpop.xlane.xlu0 %1486
        %v1488 = vsub.f32 %v1484, %v1487
        %v1489 = vmul.f32 %v1488, 1.442695
        %v1490 = vpow.pop %v1489
        %v1491 = vsel %vm894, %v1490, 0.0
        %1492 = vadd.xlane.f32.xlu0 %v1491
        %v1493 = vpop.xlane.xlu0 %1492
        %v1494 = vrcp.pop %v1493
        %v1495 = vmul.f32 %v1490, %v1494
        %v1497 = vsel %vm894, %v1495, 0
        %1499 = vmatprep.subr.mxu0 0.0
        %1500 = vmatpush1.msra.mxu0 %v1397
        %1501 = vmatprep.subr.mxu0 0.0
        %1502 = vmatpush1.msra.mxu0 %v1402
        %1503 = vmatprep.subr.mxu0 0.0
        %1504 = vmatpush1.msra.mxu0 0.0
        %1505 = vmatprep.subr.mxu0 0.0
        %1506 = vmatpush1.msra.mxu0 0.0
        %1507 = vmatprep.subr.mxu0 0.0
        %1508 = vmatpush1.msra.mxu0 0.0
        %1509 = vmatprep.subr.mxu0 0.0
        %1510 = vmatpush1.msra.mxu0 0.0
        %1511 = vmatprep.subr.mxu0 0.0
        %1512 = vmatpush1.msra.mxu0 0.0
        %1513 = vmatprep.subr.mxu0 0.0
        %1514 = vmatpush1.msra.mxu0 0.0
        %1515 = vmatprep.subr.mxu0 0.0
        %1516 = vmatpush1.msra.mxu0 0.0
        %1517 = vmatprep.subr.mxu0 0.0
        %1518 = vmatpush1.msra.mxu0 0.0
        %1519 = vmatprep.subr.mxu0 0.0
        %1520 = vmatpush1.msra.mxu0 0.0
        %1521 = vmatprep.subr.mxu0 0.0
        %1522 = vmatpush1.msra.mxu0 0.0
        %1523 = vmatprep.subr.mxu0 0.0
        %1524 = vmatpush1.msra.mxu0 0.0
        %1525 = vmatprep.subr.mxu0 0.0
        %1526 = vmatpush1.msra.mxu0 0.0
        %1527 = vmatprep.subr.mxu0 0.0
        %1528 = vmatpush1.msra.mxu0 0.0
        %1529 = vmatprep.subr.mxu0 0.0
        %1530 = vmatpush1.msra.mxu0 0.0
        %1531 = vmatprep.subr.mxu0 0.0
        %1532 = vmatpush1.msra.mxu0 0.0
        %1533 = vmatprep.subr.mxu0 0.0
        %1534 = vmatpush1.msra.mxu0 0.0
        %1535 = vmatprep.subr.mxu0 0.0
        %1536 = vmatpush1.msra.mxu0 0.0
        %1537 = vmatprep.subr.mxu0 0.0
        %1538 = vmatpush1.msra.mxu0 0.0
        %1539 = vmatprep.subr.mxu0 0.0
        %1540 = vmatpush1.msra.mxu0 0.0
        %1541 = vmatprep.subr.mxu0 0.0
        %1542 = vmatpush1.msra.mxu0 0.0
        %1543 = vmatprep.subr.mxu0 0.0
        %1544 = vmatpush1.msra.mxu0 0.0
        %1545 = vmatprep.subr.mxu0 0.0
        %1546 = vmatpush1.msra.mxu0 0.0
        %1547 = vmatprep.subr.mxu0 0.0
        %1548 = vmatpush1.msra.mxu0 0.0
        %1549 = vmatprep.subr.mxu0 0.0
        %1550 = vmatpush1.msra.mxu0 0.0
        %1551 = vmatprep.subr.mxu0 0.0
        %1552 = vmatpush1.msra.mxu0 0.0
        %1553 = vmatprep.subr.mxu0 0.0
        %1554 = vmatpush1.msra.mxu0 0.0
        %1555 = vmatprep.subr.mxu0 0.0
        %1556 = vmatpush1.msra.mxu0 0.0
        %1557 = vmatprep.subr.mxu0 0.0
        %1558 = vmatpush1.msra.mxu0 0.0
        %1559 = vmatprep.subr.mxu0 0.0
        %1560 = vmatpush1.msra.mxu0 0.0
        %1561 = vmatprep.subr.mxu0 0.0
        %1562 = vmatpush1.msra.mxu0 0.0
        %1563 = vmatprep.mubr.f32.mxu0 0.0
        %1564 = vmatmul.mubr.f32.gmra.mrb[0].mxu0 %v1497
        %v1565 = vpop.f32.mrb[0].mxu0
        %v1566 = vadd.f32 0.0, %v1565
        %v1567 = vpop.f32.mrb[0].mxu0
        %1568 = vdwg.mxu0
        %v1569 = vld [vmem:[%s9] sm:$0xff]
        %v1570 = vld [vmem:[%s9 + $0x8] sm:$0xff]
        %v1571 = vld [vmem:[%s9 + $0x10] sm:$0xff]
        %v1572 = vld [vmem:[%s9 + $0x18] sm:$0xff]
        %v1574 = vsel %vm672, %v1566, 0
        %1576 = vmatprep.subr.mxu0 0.0
        %1577 = vmatpush1.msra.mxu0 %v1569
        %1578 = vmatprep.subr.mxu0 0.0
        %1579 = vmatpush1.msra.mxu0 %v1570
        %1580 = vmatprep.subr.mxu0 0.0
        %1581 = vmatpush1.msra.mxu0 %v1571
        %1582 = vmatprep.subr.mxu0 0.0
        %1583 = vmatpush1.msra.mxu0 %v1572
        %1584 = vmatprep.subr.mxu0 0.0
        %1585 = vmatpush1.msra.mxu0 0.0
        %1586 = vmatprep.subr.mxu0 0.0
        %1587 = vmatpush1.msra.mxu0 0.0
        %1588 = vmatprep.subr.mxu0 0.0
        %1589 = vmatpush1.msra.mxu0 0.0
        %1590 = vmatprep.subr.mxu0 0.0
        %1591 = vmatpush1.msra.mxu0 0.0
        %1592 = vmatprep.subr.mxu0 0.0
        %1593 = vmatpush1.msra.mxu0 0.0
        %1594 = vmatprep.subr.mxu0 0.0
        %1595 = vmatpush1.msra.mxu0 0.0
        %1596 = vmatprep.subr.mxu0 0.0
        %1597 = vmatpush1.msra.mxu0 0.0
        %1598 = vmatprep.subr.mxu0 0.0
        %1599 = vmatpush1.msra.mxu0 0.0
        %1600 = vmatprep.subr.mxu0 0.0
        %1601 = vmatpush1.msra.mxu0 0.0
        %1602 = vmatprep.subr.mxu0 0.0
        %1603 = vmatpush1.msra.mxu0 0.0
        %1604 = vmatprep.subr.mxu0 0.0
        %1605 = vmatpush1.msra.mxu0 0.0
        %1606 = vmatprep.subr.mxu0 0.0
        %1607 = vmatpush1.msra.mxu0 0.0
        %1608 = vmatprep.subr.mxu0 0.0
        %1609 = vmatpush1.msra.mxu0 0.0
        %1610 = vmatprep.subr.mxu0 0.0
        %1611 = vmatpush1.msra.mxu0 0.0
        %1612 = vmatprep.subr.mxu0 0.0
        %1613 = vmatpush1.msra.mxu0 0.0
        %1614 = vmatprep.subr.mxu0 0.0
        %1615 = vmatpush1.msra.mxu0 0.0
        %1616 = vmatprep.subr.mxu0 0.0
        %1617 = vmatpush1.msra.mxu0 0.0
        %1618 = vmatprep.subr.mxu0 0.0
        %1619 = vmatpush1.msra.mxu0 0.0
        %1620 = vmatprep.subr.mxu0 0.0
        %1621 = vmatpush1.msra.mxu0 0.0
        %1622 = vmatprep.subr.mxu0 0.0
        %1623 = vmatpush1.msra.mxu0 0.0
        %1624 = vmatprep.subr.mxu0 0.0
        %1625 = vmatpush1.msra.mxu0 0.0
        %1626 = vmatprep.subr.mxu0 0.0
        %1627 = vmatpush1.msra.mxu0 0.0
        %1628 = vmatprep.subr.mxu0 0.0
        %1629 = vmatpush1.msra.mxu0 0.0
        %1630 = vmatprep.subr.mxu0 0.0
        %1631 = vmatpush1.msra.mxu0 0.0
        %1632 = vmatprep.subr.mxu0 0.0
        %1633 = vmatpush1.msra.mxu0 0.0
        %1634 = vmatprep.subr.mxu0 0.0
        %1635 = vmatpush1.msra.mxu0 0.0
        %1636 = vmatprep.subr.mxu0 0.0
        %1637 = vmatpush1.msra.mxu0 0.0
        %1638 = vmatprep.subr.mxu0 0.0
        %1639 = vmatpush1.msra.mxu0 0.0
        %1640 = vmatprep.mubr.f32.mxu0 0.0
        %1641 = vmatmul.mubr.f32.gmra.mrb[0].mxu0 %v1574
        %v1642 = vpop.f32.mrb[0].mxu0
        %v1643 = vadd.f32 %v1163, %v1642
        %v1644 = vpop.f32.mrb[0].mxu0
        %1645 = vdwg.mxu0
        %v1646 = vsel %vm672, %v1643, 0.0
        %1647 = vadd.xlane.f32.xlu0 %v1646
        %v1648 = vpop.xlane.xlu0 %1647
        %v1649 = vmul.f32 %v1648, %v1137
        %v1650 = vsub.f32 %v1643, %v1649
        %v1651 = vmul.f32 %v1650, %v1650
        %v1652 = vsel %vm672, %v1651, 0.0
        %1653 = vadd.xlane.f32.xlu0 %v1652
        %v1654 = vpop.xlane.xlu0 %1653
        %v1655 = vmul.f32 %v1654, %v1137
        %v1656 = vadd.f32 %v1655, 1e-05
        %v1657 = vrsqrt.pop %v1656
        %v1658 = vmul.f32 %v1650, %v1657
        %v1659 = vld [vmem:[%s16] sm:$0x1]
        %v1661 = vlaneseq
        %v1662 = vshrl.u32 %v1661, 7
        %v1663 = vsub.s32 0, %v1662
        %v1664 = vrot.slane %v1659, %v1663
        %v1666 = vmul.f32 %v1658, %v1664
        %v1667 = vld [vmem:[%s17] sm:$0x1]
        %v1669 = vlaneseq
        %v1670 = vshrl.u32 %v1669, 7
        %v1671 = vsub.s32 0, %v1670
        %v1672 = vrot.slane %v1667, %v1671
        %v1674 = vadd.f32 %v1666, %v1672
        %v1675 = vld [vmem:[%s12] sm:$0xff]
        %v1676 = vld [vmem:[%s12 + $0x8] sm:$0xff]
        %v1677 = vld [vmem:[%s12 + $0x10] sm:$0xff]
        %v1678 = vld [vmem:[%s12 + $0x18] sm:$0xff]
        %v1679 = vld [vmem:[%s13] sm:$0x1]
        %v1681 = vlaneseq
        %v1682 = vshrl.u32 %v1681, 7
        %v1683 = vsub.s32 0, %v1682
        %v1684 = vrot.slane %v1679, %v1683
        %v1687 = vsel %vm672, %v1674, 0
        %1689 = vmatprep.subr.mxu0 0.0
        %1690 = vmatpush1.msra.mxu0 %v1675
        %1691 = vmatprep.subr.mxu0 0.0
        %1692 = vmatpush1.msra.mxu0 %v1676
        %1693 = vmatprep.subr.mxu0 0.0
        %1694 = vmatpush1.msra.mxu0 %v1677
        %1695 = vmatprep.subr.mxu0 0.0
        %1696 = vmatpush1.msra.mxu0 %v1678
        %1697 = vmatprep.subr.mxu0 0.0
        %1698 = vmatpush1.msra.mxu0 0.0
        %1699 = vmatprep.subr.mxu0 0.0
        %1700 = vmatpush1.msra.mxu0 0.0
        %1701 = vmatprep.subr.mxu0 0.0
        %1702 = vmatpush1.msra.mxu0 0.0
        %1703 = vmatprep.subr.mxu0 0.0
        %1704 = vmatpush1.msra.mxu0 0.0
        %1705 = vmatprep.subr.mxu0 0.0
        %1706 = vmatpush1.msra.mxu0 0.0
        %1707 = vmatprep.subr.mxu0 0.0
        %1708 = vmatpush1.msra.mxu0 0.0
        %1709 = vmatprep.subr.mxu0 0.0
        %1710 = vmatpush1.msra.mxu0 0.0
        %1711 = vmatprep.subr.mxu0 0.0
        %1712 = vmatpush1.msra.mxu0 0.0
        %1713 = vmatprep.subr.mxu0 0.0
        %1714 = vmatpush1.msra.mxu0 0.0
        %1715 = vmatprep.subr.mxu0 0.0
        %1716 = vmatpush1.msra.mxu0 0.0
        %1717 = vmatprep.subr.mxu0 0.0
        %1718 = vmatpush1.msra.mxu0 0.0
        %1719 = vmatprep.subr.mxu0 0.0
        %1720 = vmatpush1.msra.mxu0 0.0
        %1721 = vmatprep.subr.mxu0 0.0
        %1722 = vmatpush1.msra.mxu0 0.0
        %1723 = vmatprep.subr.mxu0 0.0
        %1724 = vmatpush1.msra.mxu0 0.0
        %1725 = vmatprep.subr.mxu0 0.0
        %1726 = vmatpush1.msra.mxu0 0.0
        %1727 = vmatprep.subr.mxu0 0.0
        %1728 = vmatpush1.msra.mxu0 0.0
        %1729 = vmatprep.subr.mxu0 0.0
        %1730 = vmatpush1.msra.mxu0 0.0
        %1731 = vmatprep.subr.mxu0 0.0
        %1732 = vmatpush1.msra.mxu0 0.0
        %1733 = vmatprep.subr.mxu0 0.0
        %1734 = vmatpush1.msra.mxu0 0.0
        %1735 = vmatprep.subr.mxu0 0.0
        %1736 = vmatpush1.msra.mxu0 0.0
        %1737 = vmatprep.subr.mxu0 0.0
        %1738 = vmatpush1.msra.mxu0 0.0
        %1739 = vmatprep.subr.mxu0 0.0
        %1740 = vmatpush1.msra.mxu0 0.0
        %1741 = vmatprep.subr.mxu0 0.0
        %1742 = vmatpush1.msra.mxu0 0.0
        %1743 = vmatprep.subr.mxu0 0.0
        %1744 = vmatpush1.msra.mxu0 0.0
        %1745 = vmatprep.subr.mxu0 0.0
        %1746 = vmatpush1.msra.mxu0 0.0
        %1747 = vmatprep.subr.mxu0 0.0
        %1748 = vmatpush1.msra.mxu0 0.0
        %1749 = vmatprep.subr.mxu0 0.0
        %1750 = vmatpush1.msra.mxu0 0.0
        %1751 = vmatprep.subr.mxu0 0.0
        %1752 = vmatpush1.msra.mxu0 0.0
        %1753 = vmatprep.mubr.f32.mxu0 0.0
        %1754 = vmatmul.mubr.f32.gmra.mrb[0].mxu0 %v1687
        %v1755 = vpop.f32.mrb[0].mxu0
        %v1756 = vadd.f32 %v1684, %v1755
        %v1757 = vpop.f32.mrb[0].mxu0
        %1758 = vdwg.mxu0
        %vm1759 = vcmp.gt.f32.partialorder %v1756, 0.0
        %v1760 = vmin.f32 %v1756, 0.0
        %v1761 = vmul.f32 %v1760, 1.442695
        %v1762 = vpow.pop %v1761
        %v1763 = vsub.f32 %v1762, 1.0
        %v1764 = vsel %vm1759, %v1756, %v1763
        %v1765 = vld [vmem:[%s10] sm:$0xff]
        %v1766 = vld [vmem:[%s10 + $0x8] sm:$0xff]
        %v1767 = vld [vmem:[%s10 + $0x10] sm:$0xff]
        %v1768 = vld [vmem:[%s10 + $0x18] sm:$0xff]
        %v1769 = vld [vmem:[%s11] sm:$0x1]
        %v1771 = vlaneseq
        %v1772 = vshrl.u32 %v1771, 7
        %v1773 = vsub.s32 0, %v1772
        %v1774 = vrot.slane %v1769, %v1773
        %v1777 = vsel %vm672, %v1764, 0
        %1779 = vmatprep.subr.mxu0 0.0
        %1780 = vmatpush1.msra.mxu0 %v1765
        %1781 = vmatprep.subr.mxu0 0.0
        %1782 = vmatpush1.msra.mxu0 %v1766
        %1783 = vmatprep.subr.mxu0 0.0
        %1784 = vmatpush1.msra.mxu0 %v1767
        %1785 = vmatprep.subr.mxu0 0.0
        %1786 = vmatpush1.msra.mxu0 %v1768
        %1787 = vmatprep.subr.mxu0 0.0
        %1788 = vmatpush1.msra.mxu0 0.0
        %1789 = vmatprep.subr.mxu0 0.0
        %1790 = vmatpush1.msra.mxu0 0.0
        %1791 = vmatprep.subr.mxu0 0.0
        %1792 = vmatpush1.msra.mxu0 0.0
        %1793 = vmatprep.subr.mxu0 0.0
        %1794 = vmatpush1.msra.mxu0 0.0
        %1795 = vmatprep.subr.mxu0 0.0
        %1796 = vmatpush1.msra.mxu0 0.0
        %1797 = vmatprep.subr.mxu0 0.0
        %1798 = vmatpush1.msra.mxu0 0.0
        %1799 = vmatprep.subr.mxu0 0.0
        %1800 = vmatpush1.msra.mxu0 0.0
        %1801 = vmatprep.subr.mxu0 0.0
        %1802 = vmatpush1.msra.mxu0 0.0
        %1803 = vmatprep.subr.mxu0 0.0
        %1804 = vmatpush1.msra.mxu0 0.0
        %1805 = vmatprep.subr.mxu0 0.0
        %1806 = vmatpush1.msra.mxu0 0.0
        %1807 = vmatprep.subr.mxu0 0.0
        %1808 = vmatpush1.msra.mxu0 0.0
        %1809 = vmatprep.subr.mxu0 0.0
        %1810 = vmatpush1.msra.mxu0 0.0
        %1811 = vmatprep.subr.mxu0 0.0
        %1812 = vmatpush1.msra.mxu0 0.0
        %1813 = vmatprep.subr.mxu0 0.0
        %1814 = vmatpush1.msra.mxu0 0.0
        %1815 = vmatprep.subr.mxu0 0.0
        %1816 = vmatpush1.msra.mxu0 0.0
        %1817 = vmatprep.subr.mxu0 0.0
        %1818 = vmatpush1.msra.mxu0 0.0
        %1819 = vmatprep.subr.mxu0 0.0
        %1820 = vmatpush1.msra.mxu0 0.0
        %1821 = vmatprep.subr.mxu0 0.0
        %1822 = vmatpush1.msra.mxu0 0.0
        %1823 = vmatprep.subr.mxu0 0.0
        %1824 = vmatpush1.msra.mxu0 0.0
        %1825 = vmatprep.subr.mxu0 0.0
        %1826 = vmatpush1.msra.mxu0 0.0
        %1827 = vmatprep.subr.mxu0 0.0
        %1828 = vmatpush1.msra.mxu0 0.0
        %1829 = vmatprep.subr.mxu0 0.0
        %1830 = vmatpush1.msra.mxu0 0.0
        %1831 = vmatprep.subr.mxu0 0.0
        %1832 = vmatpush1.msra.mxu0 0.0
        %1833 = vmatprep.subr.mxu0 0.0
        %1834 = vmatpush1.msra.mxu0 0.0
        %1835 = vmatprep.subr.mxu0 0.0
        %1836 = vmatpush1.msra.mxu0 0.0
        %1837 = vmatprep.subr.mxu0 0.0
        %1838 = vmatpush1.msra.mxu0 0.0
        %1839 = vmatprep.subr.mxu0 0.0
        %1840 = vmatpush1.msra.mxu0 0.0
        %1841 = vmatprep.subr.mxu0 0.0
        %1842 = vmatpush1.msra.mxu0 0.0
        %1843 = vmatprep.mubr.f32.mxu0 0.0
        %1844 = vmatmul.mubr.f32.gmra.mrb[0].mxu0 %v1777
        %v1845 = vpop.f32.mrb[0].mxu0
        %v1846 = vadd.f32 %v1774, %v1845
        %v1847 = vpop.f32.mrb[0].mxu0
        %1848 = vdwg.mxu0
        %v1849 = vadd.f32 %v1674, %v1846
        %v1850 = vsel %vm672, %v1849, 0.0
        %1851 = vadd.xlane.f32.xlu0 %v1850
        %v1852 = vpop.xlane.xlu0 %1851
        %v1853 = vmul.f32 %v1852, %v1137
        %v1854 = vsub.f32 %v1849, %v1853
        %v1855 = vmul.f32 %v1854, %v1854
        %v1856 = vsel %vm672, %v1855, 0.0
        %1857 = vadd.xlane.f32.xlu0 %v1856
        %v1858 = vpop.xlane.xlu0 %1857
        %v1859 = vmul.f32 %v1858, %v1137
        %v1860 = vadd.f32 %v1859, 1e-05
        %v1861 = vrsqrt.pop %v1860
        %v1862 = vmul.f32 %v1854, %v1861
        %v1863 = vld [vmem:[%s18] sm:$0x1]
        %v1865 = vlaneseq
        %v1866 = vshrl.u32 %v1865, 7
        %v1867 = vsub.s32 0, %v1866
        %v1868 = vrot.slane %v1863, %v1867
        %v1870 = vmul.f32 %v1862, %v1868
        %v1871 = vld [vmem:[%s19] sm:$0x1]
        %v1873 = vlaneseq
        %v1874 = vshrl.u32 %v1873, 7
        %v1875 = vsub.s32 0, %v1874
        %v1876 = vrot.slane %v1871, %v1875
        %v1878 = vadd.f32 %v1870, %v1876
        %1879 = vst.msk [vmem:[%s659] sm:$0xff] %vm672, %v1878
        %s1880 = sand.u32 %s475, 1
        %s1881 = scalar_lea.sflag [#allocation4], %s1880
        %s1882 = sand.u32 %s475, 1
        %s1883 = smul.addr %s1882, 8
        %s1884 = scalar_lea.vmem [#allocation5], %s1883
        // Predicated region
        $region105: #{tpu_custom_call.1} parent=99 // pred_check
          %p1885 = pneg %p485
        $region106: #{tpu_custom_call.1} parent=99 // pred_check_branch
          %1887 = sbr.rel (%p1885) target = $region108
        $region107: #{tpu_custom_call.1} parent=99 // pred_region
          %s1889 = ssub.s32 128, 128
          %1890 = vsyncadd %s1881, %s1889
          %s1891 = smul.addr %s37, 128
          %s1892 = scalar_lea.hbm %s20, %s1891
          %s1894 = sshll.u32 %s1884, 4
          %s1895 = int_to_ptr.vmem [resolvable:$true] %s1894
          %1897 = dma.vmem_to_hbm [thread:$0]  %s1895, 128, %s1892, %s1881
        $region108: #{tpu_custom_call.1} parent=99 // pred_fallthru
          _
      $region100: #{tpu_custom_call.1} parent=5 // pred_fallthru
        _
      %p1898 = scmp.le.s32.totalorder 2, %s32
      // Predicated region
      $region109: #{tpu_custom_call.1} parent=5 // pred_check
        %p1899 = pneg %p1898
      $region110: #{tpu_custom_call.1} parent=5 // pred_check_branch
        %1901 = sbr.rel (%p1899) target = $region112
      $region111: #{tpu_custom_call.1} parent=5 // pred_region
        %s1902 = ssub.s32 %s32, 2
        // Predicated region
        $region113: #{tpu_custom_call.1} parent=111 // pred_check
          %p1903 = pneg %p491
        $region114: #{tpu_custom_call.1} parent=111 // pred_check_branch
          %1905 = sbr.rel (%p1903) target = $region116
        $region115: #{tpu_custom_call.1} parent=111 // pred_region
          %s1906 = sand.u32 %s476, 1
          %s1907 = scalar_lea.sflag [#allocation4], %s1906
          %s1908 = sand.u32 %s476, 1
          %s1909 = smul.addr %s1908, 8
          %s1910 = scalar_lea.vmem [#allocation5], %s1909
          %1911 = dma.done %s1907, 128
        $region116: #{tpu_custom_call.1} parent=111 // pred_fallthru
          _
      $region112: #{tpu_custom_call.1} parent=5 // pred_fallthru
        _
    $region6: #{tpu_custom_call.1} parent=1 // loop_footer
      %s36 = sadd.s32 1, %s32
    $region7: #{tpu_custom_call.1} parent=1 // loop_footer_branch
      %31 = sbr.rel target = $region3
    $region8: #{tpu_custom_call.1} parent=1 // loop_exit
      _
    %1912 = vsyncpa [#allocation3], 1
    %s1913 = scalar_lea.sflag [#allocation3], 1
    %1914 = vsyncpa %s1913, 1
    %1915 = vsyncpa [#allocation4], 1
    %s1916 = scalar_lea.sflag [#allocation4], 1
    %1917 = vsyncpa %s1916, 1

</llo_original>
